<compile_context>
chip_gen: v6e
topology: v6e:2x2x1
jax: 0.10.0
libtpu: 0.0.40
codegen_flags: <defaults>
</compile_context>

<pallas_src>
import functools
import math

import jax
import jax.numpy as jnp
from jax.experimental import pallas as pl
from jax.experimental.pallas import tpu as pltpu

LANE = 128  # lane padding for all hidden / output widths


def _round_up(x, m):
    return -(-x // m) * m


def _mlp_kernel(x_ref, w1_ref, w2_ref, w3_ref, w4_ref, w5_ref, b_ref, o_ref):
    """Whole forward pass for one batch tile, fully resident in VMEM.

    x_ref:  (TILE_B, F_pad) input dtype (cast to bf16 in-kernel)
    wN_ref: (in_pad, 128)   bf16   (BN affine already folded into W/b)
    b_ref:  (8, 128)        f32    row l = folded bias of layer l (rows 5..7 zero)
    o_ref:  (TILE_B, 128)   bf16
    """
    b = b_ref[...]  # single small (8, 128) f32 load
    # Pre-slice per-layer bias rows so their broadcasts sit off the dot chain.
    b0, b1, b2, b3, b4 = (b[i:i + 1, :] for i in range(5))

    def hidden_layer(h_bf16, w_ref, bias):
        acc = jnp.dot(h_bf16, w_ref[...], preferred_element_type=jnp.float32)
        acc = acc + bias                                    # bias add in f32
        return jnp.maximum(acc, 0.0).astype(jnp.bfloat16)   # ReLU in f32, bf16 for next dot

    h = x_ref[...].astype(jnp.bfloat16)   # in-kernel cast: x touched once in HBM
    h = hidden_layer(h, w1_ref, b0)
    h = hidden_layer(h, w2_ref, b1)
    h = hidden_layer(h, w3_ref, b2)
    h = hidden_layer(h, w4_ref, b3)
    # Output head (no activation / BN); bf16 writeback halves output traffic.
    o_ref[...] = (jnp.dot(h, w5_ref[...], preferred_element_type=jnp.float32)
                  + b4).astype(jnp.bfloat16)


def init_params(key, n_feature, n_hidden, n_output, dtype=jnp.float32):
    """Deterministic parameter init mimicking the torch module's shapes.

    Weights are stored as (in, out) == torch nn.Linear (out, in).T.
    BN running stats + affine are pre-reduced to (scale, shift).
    """
    dims = [n_feature, n_hidden, n_hidden // 2, n_hidden // 4, n_hidden // 8,
            n_output]
    eps = 1e-5
    params = []
    keys = jax.random.split(key, 5 * 4)
    ki = 0
    for li in range(5):
        fan_in, fan_out = dims[li], dims[li + 1]
        bound = 1.0 / jnp.sqrt(fan_in)
        w = jax.random.uniform(keys[ki], (fan_in, fan_out), dtype,
                               minval=-bound, maxval=bound); ki += 1
        b = jax.random.uniform(keys[ki], (1, fan_out), dtype,
                               minval=-bound, maxval=bound); ki += 1
        if li < 4:
            gamma = 1.0 + 0.1 * jax.random.normal(keys[ki], (1, fan_out), dtype); ki += 1
            beta = 0.05 * jax.random.normal(keys[ki], (1, fan_out), dtype); ki += 1
            running_mean = jnp.zeros((1, fan_out), dtype)
            running_var = jnp.ones((1, fan_out), dtype)
            scale = gamma / jnp.sqrt(running_var + eps)
            shift = beta - running_mean * scale
            params.append((w, b, scale, shift))
        else:
            params.append((w, b))
    return params


def fold_and_pad_params(params, n_feature, lane=LANE):
    """Fold each BN affine into the *following* Linear, then zero-pad widths to `lane`.

      (h*s + t) @ W + b  ==  h @ (diag(s) @ W) + (t @ W + b)

    Returns:
      padded_ws: list of 5 bf16 weights, shapes (F_pad, lane) and (lane, lane) x4
      b_pack:    (8, lane) f32, rows 0..4 = folded biases, rows 5..7 zero.
    """
    (w1, b1, s1, t1), (w2, b2, s2, t2), (w3, b3, s3, t3), (w4, b4, s4, t4), (w5, b5) = params

    def fold(s, t, w, b):
        return s.reshape(-1, 1) * w, t @ w + b

    w2f, b2f = fold(s1, t1, w2, b2)
    w3f, b3f = fold(s2, t2, w3, b3)
    w4f, b4f = fold(s3, t3, w4, b4)
    w5f, b5f = fold(s4, t4, w5, b5)

    ws = [w1, w2f, w3f, w4f, w5f]
    bs = [b1, b2f, b3f, b4f, b5f]

    f_pad = _round_up(n_feature, lane)
    in_dims = [f_pad] + [lane] * 4
    padded_ws = []
    for w, in_p in zip(ws, in_dims):
        wp = jnp.zeros((in_p, lane), jnp.float32).at[:w.shape[0], :w.shape[1]].set(w)
        padded_ws.append(wp.astype(jnp.bfloat16))

    b_pack = jnp.zeros((8, lane), jnp.float32)
    for i, b in enumerate(bs):
        b_pack = b_pack.at[i, :b.shape[-1]].set(b.reshape(-1))
    return padded_ws, b_pack


@functools.partial(jax.jit, static_argnames=("n_output", "single_buffer_weights"))
def _mlp_forward_impl(x_nchw, padded_ws, b_pack, n_output, single_buffer_weights):
    B = x_nchw.shape[0]
    F = math.prod(x_nchw.shape[1:])
    f_pad, lane = padded_ws[0].shape
    x = x_nchw.reshape(B, F)          # torch: X.view(B, -1); dtype kept, cast in-kernel

    # --- Batch tiling -------------------------------------------------------
    b_al = _round_up(B, 8)            # sublane-aligned batch
    tile_b = min(b_al, 1024)          # big tiles amortize ~0.35 us/grid-step overhead
    # Give the grid >= 2 steps when the batch allows it so both v7x TensorCores
    # get work (also minimizes padding for ragged batches); no-op for B <= 8.
    if b_al > 8 and b_al // tile_b < 2:
        tile_b = _round_up(-(-b_al // 2), 8)
    b_pad = _round_up(b_al, tile_b)

    # Pad only when actually needed (demo: F=1024 is lane-aligned, only 6 tiny
    # tail rows are added for B=2). When B % tile_b == 0 and F % 128 == 0, x is
    # fed to the kernel with zero extra HBM passes.
    if B != b_pad or F != f_pad:
        x = jnp.pad(x, ((0, b_pad - B), (0, f_pad - F)))

    grid = (b_pad // tile_b,)

    # Weights / packed bias are grid-invariant (constant index_map): request a
    # single VMEM buffer for them to save ~0.5-0.7 MiB (matters most on v7x).
    resident = {"pipeline_mode": pl.Buffered(1)} if single_buffer_weights else {}
    w_specs = [pl.BlockSpec(w.shape, lambda i: (0, 0), **resident) for w in padded_ws]
    b_spec = pl.BlockSpec(b_pack.shape, lambda i: (0, 0), **resident)

    out = pl.pallas_call(
        _mlp_kernel,
        out_shape=jax.ShapeDtypeStruct((b_pad, lane), jnp.bfloat16),
        grid=grid,
        in_specs=([pl.BlockSpec((tile_b, f_pad), lambda i: (i, 0))]
                  + w_specs
                  + [b_spec]),
        out_specs=pl.BlockSpec((tile_b, lane), lambda i: (i, 0)),
        compiler_params=pltpu.CompilerParams(
            dimension_semantics=("parallel",),
            # Explicit budget: x-tile (<=4 MiB f32) x2 buffers + bf16 out x2 +
            # ~0.4 MiB weights -> ~9 MiB, comfortably inside 32 MiB on all
            # generations (v7x physical VMEM is 64 MiB).
            vmem_limit_bytes=32 * 1024 * 1024),
    )(x, *padded_ws, b_pack)

    return out[:B, :n_output]


def mlp_forward(x_nchw, padded_ws, b_pack, n_output):
    """Wrapper: try single-buffered resident weights, fall back if unsupported."""
    try:
        out = _mlp_forward_impl(x_nchw, padded_ws, b_pack, n_output, True)
        return jax.block_until_ready(out)
    except Exception:
        out = _mlp_forward_impl(x_nchw, padded_ws, b_pack, n_output, False)
        return jax.block_until_ready(out)


def _reference_forward(x_nchw, params):
    """Plain-JAX f32 reference (unfolded BN) for correctness checking."""
    B = x_nchw.shape[0]
    h = x_nchw.reshape(B, -1).astype(jnp.float32)
    for li, p in enumerate(params):
        if li < 4:
            w, b, s, t = p
            h = jnp.maximum(h @ w + b, 0.0) * s + t
        else:
            w, b = p
            h = h @ w + b
    return h


if __name__ == "__main__":
    # NCHW input (2, 4, 16, 16) -> n_feature = 4 * 16 * 16 = 1024.
    B, C, H, W = 2, 4, 16, 16
    n_feature = C * H * W
    n_hidden = 32
    n_output = 10

    key = jax.random.PRNGKey(0)
    kx, kp = jax.random.split(key)
    x = jax.random.normal(kx, (B, C, H, W), jnp.float32)

    params = init_params(kp, n_feature, n_hidden, n_output)
    padded_ws, b_pack = fold_and_pad_params(params, n_feature)

    out = mlp_forward(x, padded_ws, b_pack, n_output)
    out = jax.block_until_ready(out)

    ref = _reference_forward(x, params)
    assert out.shape == (B, n_output)
    # bf16 weights/activations/output (f32 accumulation) vs. f32 reference.
    assert jnp.allclose(out.astype(jnp.float32), ref, atol=2.5e-2, rtol=2.5e-2), \
        "mismatch vs reference"

    print("KERNEL_OK")
</pallas_src>

<mosaic_0001>
module attributes {stable_mosaic.version = 11 : i64} {
  func.func @_mlp_kernel(%arg0: i32, %arg1: memref<8x1024xf32, #tpu.memory_space<vmem>>, %arg2: memref<1024x128xbf16, #tpu.memory_space<vmem>>, %arg3: memref<128x128xbf16, #tpu.memory_space<vmem>>, %arg4: memref<128x128xbf16, #tpu.memory_space<vmem>>, %arg5: memref<128x128xbf16, #tpu.memory_space<vmem>>, %arg6: memref<128x128xbf16, #tpu.memory_space<vmem>>, %arg7: memref<8x128xf32, #tpu.memory_space<vmem>>, %arg8: memref<8x128xbf16, #tpu.memory_space<vmem>>) attributes {dimension_semantics = [#tpu.dimension_semantics<parallel>], iteration_bounds = array<i64: 1>, scalar_prefetch = 0 : i64, scratch_operands = 0 : i64, tpu.core_type = #tpu.core_type<tc>, window_params = [{transform_indices = @transform_0, window_bounds = array<i64: 8, 1024>}, {pipeline_mode = #tpu.pipeline_mode<synchronous>, transform_indices = @transform_1, window_bounds = array<i64: 1024, 128>}, {pipeline_mode = #tpu.pipeline_mode<synchronous>, transform_indices = @transform_2, window_bounds = array<i64: 128, 128>}, {pipeline_mode = #tpu.pipeline_mode<synchronous>, transform_indices = @transform_3, window_bounds = array<i64: 128, 128>}, {pipeline_mode = #tpu.pipeline_mode<synchronous>, transform_indices = @transform_4, window_bounds = array<i64: 128, 128>}, {pipeline_mode = #tpu.pipeline_mode<synchronous>, transform_indices = @transform_5, window_bounds = array<i64: 128, 128>}, {pipeline_mode = #tpu.pipeline_mode<synchronous>, transform_indices = @transform_6, window_bounds = array<i64: 8, 128>}, {transform_indices = @transform_7, window_bounds = array<i64: 8, 128>}]} {
    %c0 = arith.constant 0 : index
    %c0_0 = arith.constant 0 : index
    %0 = vector.load %arg7[%c0, %c0_0] : memref<8x128xf32, #tpu.memory_space<vmem>>, vector<8x128xf32>
    %1 = vector.extract_strided_slice %0 {offsets = [0, 0], sizes = [1, 128], strides = [1, 1]} : vector<8x128xf32> to vector<1x128xf32>
    %2 = vector.extract_strided_slice %0 {offsets = [1, 0], sizes = [1, 128], strides = [1, 1]} : vector<8x128xf32> to vector<1x128xf32>
    %3 = vector.extract_strided_slice %0 {offsets = [2, 0], sizes = [1, 128], strides = [1, 1]} : vector<8x128xf32> to vector<1x128xf32>
    %4 = vector.extract_strided_slice %0 {offsets = [3, 0], sizes = [1, 128], strides = [1, 1]} : vector<8x128xf32> to vector<1x128xf32>
    %5 = vector.extract_strided_slice %0 {offsets = [4, 0], sizes = [1, 128], strides = [1, 1]} : vector<8x128xf32> to vector<1x128xf32>
    %c0_1 = arith.constant 0 : index
    %c0_2 = arith.constant 0 : index
    %6 = vector.load %arg1[%c0_1, %c0_2] : memref<8x1024xf32, #tpu.memory_space<vmem>>, vector<8x1024xf32>
    %7 = arith.truncf %6 : vector<8x1024xf32> to vector<8x1024xbf16>
    %c0_3 = arith.constant 0 : index
    %c0_4 = arith.constant 0 : index
    %8 = vector.load %arg2[%c0_3, %c0_4] : memref<1024x128xbf16, #tpu.memory_space<vmem>>, vector<1024x128xbf16>
    %cst = arith.constant dense<0.000000e+00> : vector<8x128xf32>
    %9 = tpu.matmul %7, %8, %cst {dimension_numbers = #tpu.dot_dimension_numbers<[1], [0], [0], [1], [0, 0, 1, 1], [], []>} : vector<8x1024xbf16>, vector<1024x128xbf16>, vector<8x128xf32> -> vector<8x128xf32>
    %10 = vector.broadcast %1 : vector<1x128xf32> to vector<8x128xf32>
    %11 = arith.addf %9, %10 : vector<8x128xf32>
    %cst_5 = arith.constant 0.000000e+00 : f32
    %12 = vector.broadcast %cst_5 : f32 to vector<8x128xf32>
    %13 = arith.maximumf %11, %12 : vector<8x128xf32>
    %14 = arith.truncf %13 : vector<8x128xf32> to vector<8x128xbf16>
    %c0_6 = arith.constant 0 : index
    %c0_7 = arith.constant 0 : index
    %15 = vector.load %arg3[%c0_6, %c0_7] : memref<128x128xbf16, #tpu.memory_space<vmem>>, vector<128x128xbf16>
    %cst_8 = arith.constant dense<0.000000e+00> : vector<8x128xf32>
    %16 = tpu.matmul %14, %15, %cst_8 {dimension_numbers = #tpu.dot_dimension_numbers<[1], [0], [0], [1], [0, 0, 1, 1], [], []>} : vector<8x128xbf16>, vector<128x128xbf16>, vector<8x128xf32> -> vector<8x128xf32>
    %17 = vector.broadcast %2 : vector<1x128xf32> to vector<8x128xf32>
    %18 = arith.addf %16, %17 : vector<8x128xf32>
    %cst_9 = arith.constant 0.000000e+00 : f32
    %19 = vector.broadcast %cst_9 : f32 to vector<8x128xf32>
    %20 = arith.maximumf %18, %19 : vector<8x128xf32>
    %21 = arith.truncf %20 : vector<8x128xf32> to vector<8x128xbf16>
    %c0_10 = arith.constant 0 : index
    %c0_11 = arith.constant 0 : index
    %22 = vector.load %arg4[%c0_10, %c0_11] : memref<128x128xbf16, #tpu.memory_space<vmem>>, vector<128x128xbf16>
    %cst_12 = arith.constant dense<0.000000e+00> : vector<8x128xf32>
    %23 = tpu.matmul %21, %22, %cst_12 {dimension_numbers = #tpu.dot_dimension_numbers<[1], [0], [0], [1], [0, 0, 1, 1], [], []>} : vector<8x128xbf16>, vector<128x128xbf16>, vector<8x128xf32> -> vector<8x128xf32>
    %24 = vector.broadcast %3 : vector<1x128xf32> to vector<8x128xf32>
    %25 = arith.addf %23, %24 : vector<8x128xf32>
    %cst_13 = arith.constant 0.000000e+00 : f32
    %26 = vector.broadcast %cst_13 : f32 to vector<8x128xf32>
    %27 = arith.maximumf %25, %26 : vector<8x128xf32>
    %28 = arith.truncf %27 : vector<8x128xf32> to vector<8x128xbf16>
    %c0_14 = arith.constant 0 : index
    %c0_15 = arith.constant 0 : index
    %29 = vector.load %arg5[%c0_14, %c0_15] : memref<128x128xbf16, #tpu.memory_space<vmem>>, vector<128x128xbf16>
    %cst_16 = arith.constant dense<0.000000e+00> : vector<8x128xf32>
    %30 = tpu.matmul %28, %29, %cst_16 {dimension_numbers = #tpu.dot_dimension_numbers<[1], [0], [0], [1], [0, 0, 1, 1], [], []>} : vector<8x128xbf16>, vector<128x128xbf16>, vector<8x128xf32> -> vector<8x128xf32>
    %31 = vector.broadcast %4 : vector<1x128xf32> to vector<8x128xf32>
    %32 = arith.addf %30, %31 : vector<8x128xf32>
    %cst_17 = arith.constant 0.000000e+00 : f32
    %33 = vector.broadcast %cst_17 : f32 to vector<8x128xf32>
    %34 = arith.maximumf %32, %33 : vector<8x128xf32>
    %35 = arith.truncf %34 : vector<8x128xf32> to vector<8x128xbf16>
    %c0_18 = arith.constant 0 : index
    %c0_19 = arith.constant 0 : index
    %36 = vector.load %arg6[%c0_18, %c0_19] : memref<128x128xbf16, #tpu.memory_space<vmem>>, vector<128x128xbf16>
    %cst_20 = arith.constant dense<0.000000e+00> : vector<8x128xf32>
    %37 = tpu.matmul %35, %36, %cst_20 {dimension_numbers = #tpu.dot_dimension_numbers<[1], [0], [0], [1], [0, 0, 1, 1], [], []>} : vector<8x128xbf16>, vector<128x128xbf16>, vector<8x128xf32> -> vector<8x128xf32>
    %38 = vector.broadcast %5 : vector<1x128xf32> to vector<8x128xf32>
    %39 = arith.addf %37, %38 : vector<8x128xf32>
    %40 = arith.truncf %39 : vector<8x128xf32> to vector<8x128xbf16>
    %c0_21 = arith.constant 0 : index
    %c0_22 = arith.constant 0 : index
    %41 = vector.load %arg8[%c0_21, %c0_22] : memref<8x128xbf16, #tpu.memory_space<vmem>>, vector<8x128xbf16>
    tpu.vector_store %arg8[%c0_21, %c0_22], %40 {strides = array<i32>} : memref<8x128xbf16, #tpu.memory_space<vmem>>, vector<8x128xbf16>,
    return
  }
  func.func @transform_0(%arg0: i32) -> (i32, i32) {
    %c0_i32 = arith.constant 0 : i32
    %c0_i32_0 = arith.constant 0 : i32
    return %arg0, %c0_i32 : i32, i32
  }
  func.func @transform_1(%arg0: i32) -> (i32, i32) {
    %c0_i32 = arith.constant 0 : i32
    %c0_i32_0 = arith.constant 0 : i32
    %c0_i32_1 = arith.constant 0 : i32
    return %c0_i32, %c0_i32_0 : i32, i32
  }
  func.func @transform_2(%arg0: i32) -> (i32, i32) {
    %c0_i32 = arith.constant 0 : i32
    %c0_i32_0 = arith.constant 0 : i32
    %c0_i32_1 = arith.constant 0 : i32
    return %c0_i32, %c0_i32_0 : i32, i32
  }
  func.func @transform_3(%arg0: i32) -> (i32, i32) {
    %c0_i32 = arith.constant 0 : i32
    %c0_i32_0 = arith.constant 0 : i32
    %c0_i32_1 = arith.constant 0 : i32
    return %c0_i32, %c0_i32_0 : i32, i32
  }
  func.func @transform_4(%arg0: i32) -> (i32, i32) {
    %c0_i32 = arith.constant 0 : i32
    %c0_i32_0 = arith.constant 0 : i32
    %c0_i32_1 = arith.constant 0 : i32
    return %c0_i32, %c0_i32_0 : i32, i32
  }
  func.func @transform_5(%arg0: i32) -> (i32, i32) {
    %c0_i32 = arith.constant 0 : i32
    %c0_i32_0 = arith.constant 0 : i32
    %c0_i32_1 = arith.constant 0 : i32
    return %c0_i32, %c0_i32_0 : i32, i32
  }
  func.func @transform_6(%arg0: i32) -> (i32, i32) {
    %c0_i32 = arith.constant 0 : i32
    %c0_i32_0 = arith.constant 0 : i32
    %c0_i32_1 = arith.constant 0 : i32
    return %c0_i32, %c0_i32_0 : i32, i32
  }
  func.func @transform_7(%arg0: i32) -> (i32, i32) {
    %c0_i32 = arith.constant 0 : i32
    %c0_i32_0 = arith.constant 0 : i32
    return %arg0, %c0_i32 : i32, i32
  }
}

module attributes {stable_mosaic.version = 11 : i64} {
  func.func @_mlp_kernel(%arg0: i32, %arg1: memref<8x1024xf32, #tpu.memory_space<vmem>>, %arg2: memref<1024x128xbf16, #tpu.memory_space<vmem>>, %arg3: memref<128x128xbf16, #tpu.memory_space<vmem>>, %arg4: memref<128x128xbf16, #tpu.memory_space<vmem>>, %arg5: memref<128x128xbf16, #tpu.memory_space<vmem>>, %arg6: memref<128x128xbf16, #tpu.memory_space<vmem>>, %arg7: memref<8x128xf32, #tpu.memory_space<vmem>>, %arg8: memref<8x128xbf16, #tpu.memory_space<vmem>>) attributes {dimension_semantics = [#tpu.dimension_semantics<parallel>], iteration_bounds = array<i64: 1>, scalar_prefetch = 0 : i64, scratch_operands = 0 : i64, tpu.core_type = #tpu.core_type<tc>, window_params = [{transform_indices = @transform_0, window_bounds = array<i64: 8, 1024>}, {pipeline_mode = #tpu.pipeline_mode<synchronous>, transform_indices = @transform_1, window_bounds = array<i64: 1024, 128>}, {pipeline_mode = #tpu.pipeline_mode<synchronous>, transform_indices = @transform_2, window_bounds = array<i64: 128, 128>}, {pipeline_mode = #tpu.pipeline_mode<synchronous>, transform_indices = @transform_3, window_bounds = array<i64: 128, 128>}, {pipeline_mode = #tpu.pipeline_mode<synchronous>, transform_indices = @transform_4, window_bounds = array<i64: 128, 128>}, {pipeline_mode = #tpu.pipeline_mode<synchronous>, transform_indices = @transform_5, window_bounds = array<i64: 128, 128>}, {pipeline_mode = #tpu.pipeline_mode<synchronous>, transform_indices = @transform_6, window_bounds = array<i64: 8, 128>}, {transform_indices = @transform_7, window_bounds = array<i64: 8, 128>}]} {
    %c0 = arith.constant 0 : index
    %c0_0 = arith.constant 0 : index
    %0 = vector.load %arg7[%c0, %c0_0] : memref<8x128xf32, #tpu.memory_space<vmem>>, vector<8x128xf32>
    %1 = vector.extract_strided_slice %0 {offsets = [0, 0], sizes = [1, 128], strides = [1, 1]} : vector<8x128xf32> to vector<1x128xf32>
    %2 = vector.extract_strided_slice %0 {offsets = [1, 0], sizes = [1, 128], strides = [1, 1]} : vector<8x128xf32> to vector<1x128xf32>
    %3 = vector.extract_strided_slice %0 {offsets = [2, 0], sizes = [1, 128], strides = [1, 1]} : vector<8x128xf32> to vector<1x128xf32>
    %4 = vector.extract_strided_slice %0 {offsets = [3, 0], sizes = [1, 128], strides = [1, 1]} : vector<8x128xf32> to vector<1x128xf32>
    %5 = vector.extract_strided_slice %0 {offsets = [4, 0], sizes = [1, 128], strides = [1, 1]} : vector<8x128xf32> to vector<1x128xf32>
    %c0_1 = arith.constant 0 : index
    %c0_2 = arith.constant 0 : index
    %6 = vector.load %arg1[%c0_1, %c0_2] : memref<8x1024xf32, #tpu.memory_space<vmem>>, vector<8x1024xf32>
    %7 = arith.truncf %6 : vector<8x1024xf32> to vector<8x1024xbf16>
    %c0_3 = arith.constant 0 : index
    %c0_4 = arith.constant 0 : index
    %8 = vector.load %arg2[%c0_3, %c0_4] : memref<1024x128xbf16, #tpu.memory_space<vmem>>, vector<1024x128xbf16>
    %cst = arith.constant dense<0.000000e+00> : vector<8x128xf32>
    %9 = tpu.matmul %7, %8, %cst {dimension_numbers = #tpu.dot_dimension_numbers<[1], [0], [0], [1], [0, 0, 1, 1], [], []>} : vector<8x1024xbf16>, vector<1024x128xbf16>, vector<8x128xf32> -> vector<8x128xf32>
    %10 = vector.broadcast %1 : vector<1x128xf32> to vector<8x128xf32>
    %11 = arith.addf %9, %10 : vector<8x128xf32>
    %cst_5 = arith.constant 0.000000e+00 : f32
    %12 = vector.broadcast %cst_5 : f32 to vector<8x128xf32>
    %13 = arith.maximumf %11, %12 : vector<8x128xf32>
    %14 = arith.truncf %13 : vector<8x128xf32> to vector<8x128xbf16>
    %c0_6 = arith.constant 0 : index
    %c0_7 = arith.constant 0 : index
    %15 = vector.load %arg3[%c0_6, %c0_7] : memref<128x128xbf16, #tpu.memory_space<vmem>>, vector<128x128xbf16>
    %cst_8 = arith.constant dense<0.000000e+00> : vector<8x128xf32>
    %16 = tpu.matmul %14, %15, %cst_8 {dimension_numbers = #tpu.dot_dimension_numbers<[1], [0], [0], [1], [0, 0, 1, 1], [], []>} : vector<8x128xbf16>, vector<128x128xbf16>, vector<8x128xf32> -> vector<8x128xf32>
    %17 = vector.broadcast %2 : vector<1x128xf32> to vector<8x128xf32>
    %18 = arith.addf %16, %17 : vector<8x128xf32>
    %cst_9 = arith.constant 0.000000e+00 : f32
    %19 = vector.broadcast %cst_9 : f32 to vector<8x128xf32>
    %20 = arith.maximumf %18, %19 : vector<8x128xf32>
    %21 = arith.truncf %20 : vector<8x128xf32> to vector<8x128xbf16>
    %c0_10 = arith.constant 0 : index
    %c0_11 = arith.constant 0 : index
    %22 = vector.load %arg4[%c0_10, %c0_11] : memref<128x128xbf16, #tpu.memory_space<vmem>>, vector<128x128xbf16>
    %cst_12 = arith.constant dense<0.000000e+00> : vector<8x128xf32>
    %23 = tpu.matmul %21, %22, %cst_12 {dimension_numbers = #tpu.dot_dimension_numbers<[1], [0], [0], [1], [0, 0, 1, 1], [], []>} : vector<8x128xbf16>, vector<128x128xbf16>, vector<8x128xf32> -> vector<8x128xf32>
    %24 = vector.broadcast %3 : vector<1x128xf32> to vector<8x128xf32>
    %25 = arith.addf %23, %24 : vector<8x128xf32>
    %cst_13 = arith.constant 0.000000e+00 : f32
    %26 = vector.broadcast %cst_13 : f32 to vector<8x128xf32>
    %27 = arith.maximumf %25, %26 : vector<8x128xf32>
    %28 = arith.truncf %27 : vector<8x128xf32> to vector<8x128xbf16>
    %c0_14 = arith.constant 0 : index
    %c0_15 = arith.constant 0 : index
    %29 = vector.load %arg5[%c0_14, %c0_15] : memref<128x128xbf16, #tpu.memory_space<vmem>>, vector<128x128xbf16>
    %cst_16 = arith.constant dense<0.000000e+00> : vector<8x128xf32>
    %30 = tpu.matmul %28, %29, %cst_16 {dimension_numbers = #tpu.dot_dimension_numbers<[1], [0], [0], [1], [0, 0, 1, 1], [], []>} : vector<8x128xbf16>, vector<128x128xbf16>, vector<8x128xf32> -> vector<8x128xf32>
    %31 = vector.broadcast %4 : vector<1x128xf32> to vector<8x128xf32>
    %32 = arith.addf %30, %31 : vector<8x128xf32>
    %cst_17 = arith.constant 0.000000e+00 : f32
    %33 = vector.broadcast %cst_17 : f32 to vector<8x128xf32>
    %34 = arith.maximumf %32, %33 : vector<8x128xf32>
    %35 = arith.truncf %34 : vector<8x128xf32> to vector<8x128xbf16>
    %c0_18 = arith.constant 0 : index
    %c0_19 = arith.constant 0 : index
    %36 = vector.load %arg6[%c0_18, %c0_19] : memref<128x128xbf16, #tpu.memory_space<vmem>>, vector<128x128xbf16>
    %cst_20 = arith.constant dense<0.000000e+00> : vector<8x128xf32>
    %37 = tpu.matmul %35, %36, %cst_20 {dimension_numbers = #tpu.dot_dimension_numbers<[1], [0], [0], [1], [0, 0, 1, 1], [], []>} : vector<8x128xbf16>, vector<128x128xbf16>, vector<8x128xf32> -> vector<8x128xf32>
    %38 = vector.broadcast %5 : vector<1x128xf32> to vector<8x128xf32>
    %39 = arith.addf %37, %38 : vector<8x128xf32>
    %40 = arith.truncf %39 : vector<8x128xf32> to vector<8x128xbf16>
    %c0_21 = arith.constant 0 : index
    %c0_22 = arith.constant 0 : index
    %41 = vector.load %arg8[%c0_21, %c0_22] : memref<8x128xbf16, #tpu.memory_space<vmem>>, vector<8x128xbf16>
    tpu.vector_store %arg8[%c0_21, %c0_22], %40 {strides = array<i32>} : memref<8x128xbf16, #tpu.memory_space<vmem>>, vector<8x128xbf16>,
    return
  }
  func.func @transform_0(%arg0: i32) -> (i32, i32) {
    %c0_i32 = arith.constant 0 : i32
    %c0_i32_0 = arith.constant 0 : i32
    return %arg0, %c0_i32 : i32, i32
  }
  func.func @transform_1(%arg0: i32) -> (i32, i32) {
    %c0_i32 = arith.constant 0 : i32
    %c0_i32_0 = arith.constant 0 : i32
    %c0_i32_1 = arith.constant 0 : i32
    return %c0_i32, %c0_i32_0 : i32, i32
  }
  func.func @transform_2(%arg0: i32) -> (i32, i32) {
    %c0_i32 = arith.constant 0 : i32
    %c0_i32_0 = arith.constant 0 : i32
    %c0_i32_1 = arith.constant 0 : i32
    return %c0_i32, %c0_i32_0 : i32, i32
  }
  func.func @transform_3(%arg0: i32) -> (i32, i32) {
    %c0_i32 = arith.constant 0 : i32
    %c0_i32_0 = arith.constant 0 : i32
    %c0_i32_1 = arith.constant 0 : i32
    return %c0_i32, %c0_i32_0 : i32, i32
  }
  func.func @transform_4(%arg0: i32) -> (i32, i32) {
    %c0_i32 = arith.constant 0 : i32
    %c0_i32_0 = arith.constant 0 : i32
    %c0_i32_1 = arith.constant 0 : i32
    return %c0_i32, %c0_i32_0 : i32, i32
  }
  func.func @transform_5(%arg0: i32) -> (i32, i32) {
    %c0_i32 = arith.constant 0 : i32
    %c0_i32_0 = arith.constant 0 : i32
    %c0_i32_1 = arith.constant 0 : i32
    return %c0_i32, %c0_i32_0 : i32, i32
  }
  func.func @transform_6(%arg0: i32) -> (i32, i32) {
    %c0_i32 = arith.constant 0 : i32
    %c0_i32_0 = arith.constant 0 : i32
    %c0_i32_1 = arith.constant 0 : i32
    return %c0_i32, %c0_i32_0 : i32, i32
  }
  func.func @transform_7(%arg0: i32) -> (i32, i32) {
    %c0_i32 = arith.constant 0 : i32
    %c0_i32_0 = arith.constant 0 : i32
    return %arg0, %c0_i32 : i32, i32
  }
}

</mosaic_0001>

<llo_original>
// kernel: _mlp_forward_impl.1
$region0: #{_mlp_forward_impl.1}
  #allocation0 [shape = 'u32[]', space=smem, size = 0x4, offset = 0x4, fixed_abs, tag = 'smem constant byte address 0x4 - core index']
  #allocation1 [shape = 'u32[144,128]{1,0:T(1,128)}', space=vmem, size = 0x12000, scoped, tag = 'internal scratch']
  %s0 = inlined_call_operand.vmem [shape: f32[8,1024], index: 0, kind: input, shape index: {}]
  %s1 = inlined_call_operand.hbm [shape: bf16[1024,128], index: 1, kind: input, shape index: {}]
  %s2 = inlined_call_operand.vmem [shape: bf16[128,128], index: 2, kind: input, shape index: {}]
  %s3 = inlined_call_operand.vmem [shape: bf16[128,128], index: 3, kind: input, shape index: {}]
  %s4 = inlined_call_operand.vmem [shape: bf16[128,128], index: 4, kind: input, shape index: {}]
  %s5 = inlined_call_operand.hbm [shape: bf16[128,128], index: 5, kind: input, shape index: {}]
  %s6 = inlined_call_operand.vmem [shape: f32[8,128], index: 6, kind: input, shape index: {}]
  %s7 = inlined_call_operand.vmem [shape: bf16[8,128], index: 7, kind: output, shape index: {}]
  %s8 = sld [smem:[#allocation0]]
  $region46: #{_mlp_forward_impl.1} parent=0
    _
  %s10 = ssub.s32 1, %s8
  %s11 = scalar_select 0, %s10, %s8
  $region1: #{_mlp_forward_impl.1} parent=0
    #allocation2 [shape = 'u8[262144]{0}', space=vmem, size = 0x40000, scoped, tag = 'input window, operand 1, single buffered']
    #allocation3 [shape = 's32[1]{0}', space=sflag, size = 0x4, scoped, tag = 'scoped memory for _mlp_forward_impl.1']
    #allocation4 [shape = 'u8[32768]{0}', space=vmem, size = 0x8000, scoped, tag = 'input window, operand 5, single buffered']
    #allocation5 [shape = 's32[1]{0}', space=sflag, size = 0x4, scoped, tag = 'scoped memory for _mlp_forward_impl.1']
    %12 = vsyncpa [#allocation3], 0
    %13 = vsyncpa [#allocation5], 0
    // Predicated region
    $region2: #{_mlp_forward_impl.1} parent=1 // pred_check
      _
    $region3: #{_mlp_forward_impl.1} parent=1 // pred_check_branch
      %15 = sbr.rel (0) target = $region5
    $region4: #{_mlp_forward_impl.1} parent=1 // pred_region
      _
    $region5: #{_mlp_forward_impl.1} parent=1 // pred_fallthru
      _
    // Predicated region
    $region6: #{_mlp_forward_impl.1} parent=1 // pred_check
      _
    $region7: #{_mlp_forward_impl.1} parent=1 // pred_check_branch
      %17 = sbr.rel (0) target = $region9
    $region8: #{_mlp_forward_impl.1} parent=1 // pred_region
      %s19 = ssub.s32 8192, 8192
      %20 = vsyncadd [#allocation3], %s19
      %s21 = sshll.u32 [#allocation2], 4
      %s22 = int_to_ptr.vmem [resolvable:$true] %s21
      %27 = dma.hbm_to_vmem [thread:$0]  %s1, 8192, %s22, [#allocation3], 64, 64, 4
    $region9: #{_mlp_forward_impl.1} parent=1 // pred_fallthru
      _
    // Predicated region
    $region10: #{_mlp_forward_impl.1} parent=1 // pred_check
      _
    $region11: #{_mlp_forward_impl.1} parent=1 // pred_check_branch
      %29 = sbr.rel (0) target = $region13
    $region12: #{_mlp_forward_impl.1} parent=1 // pred_region
      _
    $region13: #{_mlp_forward_impl.1} parent=1 // pred_fallthru
      _
    // Predicated region
    $region14: #{_mlp_forward_impl.1} parent=1 // pred_check
      _
    $region15: #{_mlp_forward_impl.1} parent=1 // pred_check_branch
      %31 = sbr.rel (0) target = $region17
    $region16: #{_mlp_forward_impl.1} parent=1 // pred_region
      _
    $region17: #{_mlp_forward_impl.1} parent=1 // pred_fallthru
      _
    // Predicated region
    $region18: #{_mlp_forward_impl.1} parent=1 // pred_check
      _
    $region19: #{_mlp_forward_impl.1} parent=1 // pred_check_branch
      %33 = sbr.rel (0) target = $region21
    $region20: #{_mlp_forward_impl.1} parent=1 // pred_region
      _
    $region21: #{_mlp_forward_impl.1} parent=1 // pred_fallthru
      _
    // Predicated region
    $region22: #{_mlp_forward_impl.1} parent=1 // pred_check
      _
    $region23: #{_mlp_forward_impl.1} parent=1 // pred_check_branch
      %35 = sbr.rel (0) target = $region25
    $region24: #{_mlp_forward_impl.1} parent=1 // pred_region
      %s37 = ssub.s32 1024, 1024
      %38 = vsyncadd [#allocation5], %s37
      %s39 = sshll.u32 [#allocation4], 4
      %s40 = int_to_ptr.vmem [resolvable:$true] %s39
      %45 = dma.hbm_to_vmem [thread:$0]  %s5, 1024, %s40, [#allocation5], 64, 64, 4
    $region25: #{_mlp_forward_impl.1} parent=1 // pred_fallthru
      _
    // Predicated region
    $region26: #{_mlp_forward_impl.1} parent=1 // pred_check
      _
    $region27: #{_mlp_forward_impl.1} parent=1 // pred_check_branch
      %47 = sbr.rel (0) target = $region29
    $region28: #{_mlp_forward_impl.1} parent=1 // pred_region
      _
    $region29: #{_mlp_forward_impl.1} parent=1 // pred_fallthru
      _
    // Predicated region
    $region30: #{_mlp_forward_impl.1} parent=1 // pred_check
      _
    $region31: #{_mlp_forward_impl.1} parent=1 // pred_check_branch
      %49 = sbr.rel (0) target = $region33
    $region32: #{_mlp_forward_impl.1} parent=1 // pred_region
      %50 = dma.done [#allocation3], 8192
    $region33: #{_mlp_forward_impl.1} parent=1 // pred_fallthru
      _
    // Predicated region
    $region34: #{_mlp_forward_impl.1} parent=1 // pred_check
      _
    $region35: #{_mlp_forward_impl.1} parent=1 // pred_check_branch
      %52 = sbr.rel (0) target = $region37
    $region36: #{_mlp_forward_impl.1} parent=1 // pred_region
      %53 = dma.done [#allocation5], 1024
    $region37: #{_mlp_forward_impl.1} parent=1 // pred_fallthru
      _
    %v55 = vld [vmem:[%s6] sm:$0xff]
    %v56 = vld [vmem:[%s0] sm:$0xff]
    %v57 = vld [vmem:[%s0 + $0x8] sm:$0xff]
    %v58 = vld [vmem:[%s0 + $0x10] sm:$0xff]
    %v59 = vld [vmem:[%s0 + $0x18] sm:$0xff]
    %v60 = vld [vmem:[%s0 + $0x20] sm:$0xff]
    %v61 = vld [vmem:[%s0 + $0x28] sm:$0xff]
    %v62 = vld [vmem:[%s0 + $0x30] sm:$0xff]
    %v63 = vld [vmem:[%s0 + $0x38] sm:$0xff]
    %v64 = vpack.c.bf16 %v56, %v56
    %v65 = vpack.c.bf16 %v57, %v57
    %v66 = vpack.c.bf16 %v58, %v58
    %v67 = vpack.c.bf16 %v59, %v59
    %v68 = vpack.c.bf16 %v60, %v60
    %v69 = vpack.c.bf16 %v61, %v61
    %v70 = vpack.c.bf16 %v62, %v62
    %v71 = vpack.c.bf16 %v63, %v63
    %v72 = vld [vmem:[#allocation2] sm:$0xf]
    %v73 = vld [vmem:[#allocation2 + $0x4] sm:$0xf]
    %v74 = vld [vmem:[#allocation2 + $0x8] sm:$0xf]
    %v75 = vld [vmem:[#allocation2 + $0xc] sm:$0xf]
    %v76 = vld [vmem:[#allocation2 + $0x10] sm:$0xf]
    %v77 = vld [vmem:[#allocation2 + $0x14] sm:$0xf]
    %v78 = vld [vmem:[#allocation2 + $0x18] sm:$0xf]
    %v79 = vld [vmem:[#allocation2 + $0x1c] sm:$0xf]
    %v80 = vld [vmem:[#allocation2 + $0x20] sm:$0xf]
    %v81 = vld [vmem:[#allocation2 + $0x24] sm:$0xf]
    %v82 = vld [vmem:[#allocation2 + $0x28] sm:$0xf]
    %v83 = vld [vmem:[#allocation2 + $0x2c] sm:$0xf]
    %v84 = vld [vmem:[#allocation2 + $0x30] sm:$0xf]
    %v85 = vld [vmem:[#allocation2 + $0x34] sm:$0xf]
    %v86 = vld [vmem:[#allocation2 + $0x38] sm:$0xf]
    %v87 = vld [vmem:[#allocation2 + $0x3c] sm:$0xf]
    %v88 = vld [vmem:[#allocation2 + $0x40] sm:$0xf]
    %v89 = vld [vmem:[#allocation2 + $0x44] sm:$0xf]
    %v90 = vld [vmem:[#allocation2 + $0x48] sm:$0xf]
    %v91 = vld [vmem:[#allocation2 + $0x4c] sm:$0xf]
    %v92 = vld [vmem:[#allocation2 + $0x50] sm:$0xf]
    %v93 = vld [vmem:[#allocation2 + $0x54] sm:$0xf]
    %v94 = vld [vmem:[#allocation2 + $0x58] sm:$0xf]
    %v95 = vld [vmem:[#allocation2 + $0x5c] sm:$0xf]
    %v96 = vld [vmem:[#allocation2 + $0x60] sm:$0xf]
    %v97 = vld [vmem:[#allocation2 + $0x64] sm:$0xf]
    %v98 = vld [vmem:[#allocation2 + $0x68] sm:$0xf]
    %v99 = vld [vmem:[#allocation2 + $0x6c] sm:$0xf]
    %v100 = vld [vmem:[#allocation2 + $0x70] sm:$0xf]
    %v101 = vld [vmem:[#allocation2 + $0x74] sm:$0xf]
    %v102 = vld [vmem:[#allocation2 + $0x78] sm:$0xf]
    %v103 = vld [vmem:[#allocation2 + $0x7c] sm:$0xf]
    %v104 = vld [vmem:[#allocation2 + $0x80] sm:$0xf]
    %v105 = vld [vmem:[#allocation2 + $0x84] sm:$0xf]
    %v106 = vld [vmem:[#allocation2 + $0x88] sm:$0xf]
    %v107 = vld [vmem:[#allocation2 + $0x8c] sm:$0xf]
    %v108 = vld [vmem:[#allocation2 + $0x90] sm:$0xf]
    %v109 = vld [vmem:[#allocation2 + $0x94] sm:$0xf]
    %v110 = vld [vmem:[#allocation2 + $0x98] sm:$0xf]
    %v111 = vld [vmem:[#allocation2 + $0x9c] sm:$0xf]
    %v112 = vld [vmem:[#allocation2 + $0xa0] sm:$0xf]
    %v113 = vld [vmem:[#allocation2 + $0xa4] sm:$0xf]
    %v114 = vld [vmem:[#allocation2 + $0xa8] sm:$0xf]
    %v115 = vld [vmem:[#allocation2 + $0xac] sm:$0xf]
    %v116 = vld [vmem:[#allocation2 + $0xb0] sm:$0xf]
    %v117 = vld [vmem:[#allocation2 + $0xb4] sm:$0xf]
    %v118 = vld [vmem:[#allocation2 + $0xb8] sm:$0xf]
    %v119 = vld [vmem:[#allocation2 + $0xbc] sm:$0xf]
    %v120 = vld [vmem:[#allocation2 + $0xc0] sm:$0xf]
    %v121 = vld [vmem:[#allocation2 + $0xc4] sm:$0xf]
    %v122 = vld [vmem:[#allocation2 + $0xc8] sm:$0xf]
    %v123 = vld [vmem:[#allocation2 + $0xcc] sm:$0xf]
    %v124 = vld [vmem:[#allocation2 + $0xd0] sm:$0xf]
    %v125 = vld [vmem:[#allocation2 + $0xd4] sm:$0xf]
    %v126 = vld [vmem:[#allocation2 + $0xd8] sm:$0xf]
    %v127 = vld [vmem:[#allocation2 + $0xdc] sm:$0xf]
    %v128 = vld [vmem:[#allocation2 + $0xe0] sm:$0xf]
    %v129 = vld [vmem:[#allocation2 + $0xe4] sm:$0xf]
    %v130 = vld [vmem:[#allocation2 + $0xe8] sm:$0xf]
    %v131 = vld [vmem:[#allocation2 + $0xec] sm:$0xf]
    %v132 = vld [vmem:[#allocation2 + $0xf0] sm:$0xf]
    %v133 = vld [vmem:[#allocation2 + $0xf4] sm:$0xf]
    %v134 = vld [vmem:[#allocation2 + $0xf8] sm:$0xf]
    %v135 = vld [vmem:[#allocation2 + $0xfc] sm:$0xf]
    %v136 = vld [vmem:[#allocation2 + $0x100] sm:$0xf]
    %v137 = vld [vmem:[#allocation2 + $0x104] sm:$0xf]
    %v138 = vld [vmem:[#allocation2 + $0x108] sm:$0xf]
    %v139 = vld [vmem:[#allocation2 + $0x10c] sm:$0xf]
    %v140 = vld [vmem:[#allocation2 + $0x110] sm:$0xf]
    %v141 = vld [vmem:[#allocation2 + $0x114] sm:$0xf]
    %v142 = vld [vmem:[#allocation2 + $0x118] sm:$0xf]
    %v143 = vld [vmem:[#allocation2 + $0x11c] sm:$0xf]
    %v144 = vld [vmem:[#allocation2 + $0x120] sm:$0xf]
    %v145 = vld [vmem:[#allocation2 + $0x124] sm:$0xf]
    %v146 = vld [vmem:[#allocation2 + $0x128] sm:$0xf]
    %v147 = vld [vmem:[#allocation2 + $0x12c] sm:$0xf]
    %v148 = vld [vmem:[#allocation2 + $0x130] sm:$0xf]
    %v149 = vld [vmem:[#allocation2 + $0x134] sm:$0xf]
    %v150 = vld [vmem:[#allocation2 + $0x138] sm:$0xf]
    %v151 = vld [vmem:[#allocation2 + $0x13c] sm:$0xf]
    %v152 = vld [vmem:[#allocation2 + $0x140] sm:$0xf]
    %v153 = vld [vmem:[#allocation2 + $0x144] sm:$0xf]
    %v154 = vld [vmem:[#allocation2 + $0x148] sm:$0xf]
    %v155 = vld [vmem:[#allocation2 + $0x14c] sm:$0xf]
    %v156 = vld [vmem:[#allocation2 + $0x150] sm:$0xf]
    %v157 = vld [vmem:[#allocation2 + $0x154] sm:$0xf]
    %v158 = vld [vmem:[#allocation2 + $0x158] sm:$0xf]
    %v159 = vld [vmem:[#allocation2 + $0x15c] sm:$0xf]
    %v160 = vld [vmem:[#allocation2 + $0x160] sm:$0xf]
    %v161 = vld [vmem:[#allocation2 + $0x164] sm:$0xf]
    %v162 = vld [vmem:[#allocation2 + $0x168] sm:$0xf]
    %v163 = vld [vmem:[#allocation2 + $0x16c] sm:$0xf]
    %v164 = vld [vmem:[#allocation2 + $0x170] sm:$0xf]
    %v165 = vld [vmem:[#allocation2 + $0x174] sm:$0xf]
    %v166 = vld [vmem:[#allocation2 + $0x178] sm:$0xf]
    %v167 = vld [vmem:[#allocation2 + $0x17c] sm:$0xf]
    %v168 = vld [vmem:[#allocation2 + $0x180] sm:$0xf]
    %v169 = vld [vmem:[#allocation2 + $0x184] sm:$0xf]
    %v170 = vld [vmem:[#allocation2 + $0x188] sm:$0xf]
    %v171 = vld [vmem:[#allocation2 + $0x18c] sm:$0xf]
    %v172 = vld [vmem:[#allocation2 + $0x190] sm:$0xf]
    %v173 = vld [vmem:[#allocation2 + $0x194] sm:$0xf]
    %v174 = vld [vmem:[#allocation2 + $0x198] sm:$0xf]
    %v175 = vld [vmem:[#allocation2 + $0x19c] sm:$0xf]
    %v176 = vld [vmem:[#allocation2 + $0x1a0] sm:$0xf]
    %v177 = vld [vmem:[#allocation2 + $0x1a4] sm:$0xf]
    %v178 = vld [vmem:[#allocation2 + $0x1a8] sm:$0xf]
    %v179 = vld [vmem:[#allocation2 + $0x1ac] sm:$0xf]
    %v180 = vld [vmem:[#allocation2 + $0x1b0] sm:$0xf]
    %v181 = vld [vmem:[#allocation2 + $0x1b4] sm:$0xf]
    %v182 = vld [vmem:[#allocation2 + $0x1b8] sm:$0xf]
    %v183 = vld [vmem:[#allocation2 + $0x1bc] sm:$0xf]
    %v184 = vld [vmem:[#allocation2 + $0x1c0] sm:$0xf]
    %v185 = vld [vmem:[#allocation2 + $0x1c4] sm:$0xf]
    %v186 = vld [vmem:[#allocation2 + $0x1c8] sm:$0xf]
    %v187 = vld [vmem:[#allocation2 + $0x1cc] sm:$0xf]
    %v188 = vld [vmem:[#allocation2 + $0x1d0] sm:$0xf]
    %v189 = vld [vmem:[#allocation2 + $0x1d4] sm:$0xf]
    %v190 = vld [vmem:[#allocation2 + $0x1d8] sm:$0xf]
    %v191 = vld [vmem:[#allocation2 + $0x1dc] sm:$0xf]
    %v192 = vld [vmem:[#allocation2 + $0x1e0] sm:$0xf]
    %v193 = vld [vmem:[#allocation2 + $0x1e4] sm:$0xf]
    %v194 = vld [vmem:[#allocation2 + $0x1e8] sm:$0xf]
    %v195 = vld [vmem:[#allocation2 + $0x1ec] sm:$0xf]
    %v196 = vld [vmem:[#allocation2 + $0x1f0] sm:$0xf]
    %v197 = vld [vmem:[#allocation2 + $0x1f4] sm:$0xf]
    %v198 = vld [vmem:[#allocation2 + $0x1f8] sm:$0xf]
    %v199 = vld [vmem:[#allocation2 + $0x1fc] sm:$0xf]
    %v200 = vlaneseq
    %v201 = vshrl.u32 %v200, 7
    %v202 = vsub.s32 0, %v201
    %v203 = vrot.slane %v55, %v202
    %v332 = vunpack.c.l.b16 %v72
    %v333 = vunpack.c.l.b16 %v73
    %v334 = vunpack.c.l.b16 %v74
    %v335 = vunpack.c.l.b16 %v75
    %v336 = vunpack.c.l.b16 %v76
    %v337 = vunpack.c.l.b16 %v77
    %v338 = vunpack.c.l.b16 %v78
    %v339 = vunpack.c.l.b16 %v79
    %v340 = vunpack.c.l.b16 %v80
    %v341 = vunpack.c.l.b16 %v81
    %v342 = vunpack.c.l.b16 %v82
    %v343 = vunpack.c.l.b16 %v83
    %v344 = vunpack.c.l.b16 %v84
    %v345 = vunpack.c.l.b16 %v85
    %v346 = vunpack.c.l.b16 %v86
    %v347 = vunpack.c.l.b16 %v87
    %v348 = vunpack.c.l.b16 %v88
    %v349 = vunpack.c.l.b16 %v89
    %v350 = vunpack.c.l.b16 %v90
    %v351 = vunpack.c.l.b16 %v91
    %v352 = vunpack.c.l.b16 %v92
    %v353 = vunpack.c.l.b16 %v93
    %v354 = vunpack.c.l.b16 %v94
    %v355 = vunpack.c.l.b16 %v95
    %v356 = vunpack.c.l.b16 %v96
    %v357 = vunpack.c.l.b16 %v97
    %v358 = vunpack.c.l.b16 %v98
    %v359 = vunpack.c.l.b16 %v99
    %v360 = vunpack.c.l.b16 %v100
    %v361 = vunpack.c.l.b16 %v101
    %v362 = vunpack.c.l.b16 %v102
    %v363 = vunpack.c.l.b16 %v103
    %v364 = vunpack.c.l.b16 %v104
    %v365 = vunpack.c.l.b16 %v105
    %v366 = vunpack.c.l.b16 %v106
    %v367 = vunpack.c.l.b16 %v107
    %v368 = vunpack.c.l.b16 %v108
    %v369 = vunpack.c.l.b16 %v109
    %v370 = vunpack.c.l.b16 %v110
    %v371 = vunpack.c.l.b16 %v111
    %v372 = vunpack.c.l.b16 %v112
    %v373 = vunpack.c.l.b16 %v113
    %v374 = vunpack.c.l.b16 %v114
    %v375 = vunpack.c.l.b16 %v115
    %v376 = vunpack.c.l.b16 %v116
    %v377 = vunpack.c.l.b16 %v117
    %v378 = vunpack.c.l.b16 %v118
    %v379 = vunpack.c.l.b16 %v119
    %v380 = vunpack.c.l.b16 %v120
    %v381 = vunpack.c.l.b16 %v121
    %v382 = vunpack.c.l.b16 %v122
    %v383 = vunpack.c.l.b16 %v123
    %v384 = vunpack.c.l.b16 %v124
    %v385 = vunpack.c.l.b16 %v125
    %v386 = vunpack.c.l.b16 %v126
    %v387 = vunpack.c.l.b16 %v127
    %v388 = vunpack.c.l.b16 %v128
    %v389 = vunpack.c.l.b16 %v129
    %v390 = vunpack.c.l.b16 %v130
    %v391 = vunpack.c.l.b16 %v131
    %v392 = vunpack.c.l.b16 %v132
    %v393 = vunpack.c.l.b16 %v133
    %v394 = vunpack.c.l.b16 %v134
    %v395 = vunpack.c.l.b16 %v135
    %v396 = vunpack.c.l.b16 %v136
    %v397 = vunpack.c.l.b16 %v137
    %v398 = vunpack.c.l.b16 %v138
    %v399 = vunpack.c.l.b16 %v139
    %v400 = vunpack.c.l.b16 %v140
    %v401 = vunpack.c.l.b16 %v141
    %v402 = vunpack.c.l.b16 %v142
    %v403 = vunpack.c.l.b16 %v143
    %v404 = vunpack.c.l.b16 %v144
    %v405 = vunpack.c.l.b16 %v145
    %v406 = vunpack.c.l.b16 %v146
    %v407 = vunpack.c.l.b16 %v147
    %v408 = vunpack.c.l.b16 %v148
    %v409 = vunpack.c.l.b16 %v149
    %v410 = vunpack.c.l.b16 %v150
    %v411 = vunpack.c.l.b16 %v151
    %v412 = vunpack.c.l.b16 %v152
    %v413 = vunpack.c.l.b16 %v153
    %v414 = vunpack.c.l.b16 %v154
    %v415 = vunpack.c.l.b16 %v155
    %v416 = vunpack.c.l.b16 %v156
    %v417 = vunpack.c.l.b16 %v157
    %v418 = vunpack.c.l.b16 %v158
    %v419 = vunpack.c.l.b16 %v159
    %v420 = vunpack.c.l.b16 %v160
    %v421 = vunpack.c.l.b16 %v161
    %v422 = vunpack.c.l.b16 %v162
    %v423 = vunpack.c.l.b16 %v163
    %v424 = vunpack.c.l.b16 %v164
    %v425 = vunpack.c.l.b16 %v165
    %v426 = vunpack.c.l.b16 %v166
    %v427 = vunpack.c.l.b16 %v167
    %v428 = vunpack.c.l.b16 %v168
    %v429 = vunpack.c.l.b16 %v169
    %v430 = vunpack.c.l.b16 %v170
    %v431 = vunpack.c.l.b16 %v171
    %v432 = vunpack.c.l.b16 %v172
    %v433 = vunpack.c.l.b16 %v173
    %v434 = vunpack.c.l.b16 %v174
    %v435 = vunpack.c.l.b16 %v175
    %v436 = vunpack.c.l.b16 %v176
    %v437 = vunpack.c.l.b16 %v177
    %v438 = vunpack.c.l.b16 %v178
    %v439 = vunpack.c.l.b16 %v179
    %v440 = vunpack.c.l.b16 %v180
    %v441 = vunpack.c.l.b16 %v181
    %v442 = vunpack.c.l.b16 %v182
    %v443 = vunpack.c.l.b16 %v183
    %v444 = vunpack.c.l.b16 %v184
    %v445 = vunpack.c.l.b16 %v185
    %v446 = vunpack.c.l.b16 %v186
    %v447 = vunpack.c.l.b16 %v187
    %v448 = vunpack.c.l.b16 %v188
    %v449 = vunpack.c.l.b16 %v189
    %v450 = vunpack.c.l.b16 %v190
    %v451 = vunpack.c.l.b16 %v191
    %v452 = vunpack.c.l.b16 %v192
    %v453 = vunpack.c.l.b16 %v193
    %v454 = vunpack.c.l.b16 %v194
    %v455 = vunpack.c.l.b16 %v195
    %v456 = vunpack.c.l.b16 %v196
    %v457 = vunpack.c.l.b16 %v197
    %v458 = vunpack.c.l.b16 %v198
    %v459 = vunpack.c.l.b16 %v199
    %v460 = vpack.c.b16 %v333, %v332
    %v461 = vpack.c.b16 %v335, %v334
    %v462 = vpack.c.b16 %v337, %v336
    %v463 = vpack.c.b16 %v339, %v338
    %v464 = vpack.c.b16 %v341, %v340
    %v465 = vpack.c.b16 %v343, %v342
    %v466 = vpack.c.b16 %v345, %v344
    %v467 = vpack.c.b16 %v347, %v346
    %v468 = vpack.c.b16 %v349, %v348
    %v469 = vpack.c.b16 %v351, %v350
    %v470 = vpack.c.b16 %v353, %v352
    %v471 = vpack.c.b16 %v355, %v354
    %v472 = vpack.c.b16 %v357, %v356
    %v473 = vpack.c.b16 %v359, %v358
    %v474 = vpack.c.b16 %v361, %v360
    %v475 = vpack.c.b16 %v363, %v362
    %v476 = vpack.c.b16 %v365, %v364
    %v477 = vpack.c.b16 %v367, %v366
    %v478 = vpack.c.b16 %v369, %v368
    %v479 = vpack.c.b16 %v371, %v370
    %v480 = vpack.c.b16 %v373, %v372
    %v481 = vpack.c.b16 %v375, %v374
    %v482 = vpack.c.b16 %v377, %v376
    %v483 = vpack.c.b16 %v379, %v378
    %v484 = vpack.c.b16 %v381, %v380
    %v485 = vpack.c.b16 %v383, %v382
    %v486 = vpack.c.b16 %v385, %v384
    %v487 = vpack.c.b16 %v387, %v386
    %v488 = vpack.c.b16 %v389, %v388
    %v489 = vpack.c.b16 %v391, %v390
    %v490 = vpack.c.b16 %v393, %v392
    %v491 = vpack.c.b16 %v395, %v394
    %v492 = vpack.c.b16 %v397, %v396
    %v493 = vpack.c.b16 %v399, %v398
    %v494 = vpack.c.b16 %v401, %v400
    %v495 = vpack.c.b16 %v403, %v402
    %v496 = vpack.c.b16 %v405, %v404
    %v497 = vpack.c.b16 %v407, %v406
    %v498 = vpack.c.b16 %v409, %v408
    %v499 = vpack.c.b16 %v411, %v410
    %v500 = vpack.c.b16 %v413, %v412
    %v501 = vpack.c.b16 %v415, %v414
    %v502 = vpack.c.b16 %v417, %v416
    %v503 = vpack.c.b16 %v419, %v418
    %v504 = vpack.c.b16 %v421, %v420
    %v505 = vpack.c.b16 %v423, %v422
    %v506 = vpack.c.b16 %v425, %v424
    %v507 = vpack.c.b16 %v427, %v426
    %v508 = vpack.c.b16 %v429, %v428
    %v509 = vpack.c.b16 %v431, %v430
    %v510 = vpack.c.b16 %v433, %v432
    %v511 = vpack.c.b16 %v435, %v434
    %v512 = vpack.c.b16 %v437, %v436
    %v513 = vpack.c.b16 %v439, %v438
    %v514 = vpack.c.b16 %v441, %v440
    %v515 = vpack.c.b16 %v443, %v442
    %v516 = vpack.c.b16 %v445, %v444
    %v517 = vpack.c.b16 %v447, %v446
    %v518 = vpack.c.b16 %v449, %v448
    %v519 = vpack.c.b16 %v451, %v450
    %v520 = vpack.c.b16 %v453, %v452
    %v521 = vpack.c.b16 %v455, %v454
    %v522 = vpack.c.b16 %v457, %v456
    %v523 = vpack.c.b16 %v459, %v458
    %588 = vmatprep.subr.bf16.mxu0 0
    %589 = vmatpush1.bf16.msra.mxu0 %v467
    %590 = vmatprep.subr.bf16.mxu0 0
    %591 = vmatpush1.bf16.msra.mxu0 %v466
    %592 = vmatprep.subr.bf16.mxu0 0
    %593 = vmatpush1.bf16.msra.mxu0 %v465
    %594 = vmatprep.subr.bf16.mxu0 0
    %595 = vmatpush1.bf16.msra.mxu0 %v464
    %596 = vmatprep.subr.bf16.mxu0 0
    %597 = vmatpush1.bf16.msra.mxu0 %v463
    %598 = vmatprep.subr.bf16.mxu0 0
    %599 = vmatpush1.bf16.msra.mxu0 %v462
    %600 = vmatprep.subr.bf16.mxu0 0
    %601 = vmatpush1.bf16.msra.mxu0 %v461
    %602 = vmatprep.subr.bf16.mxu0 0
    %603 = vmatpush1.bf16.msra.mxu0 %v460
    %604 = vmatprep.subr.bf16.mxu0 0
    %605 = vmatpush2.bf16.msra.mxu0 %v475
    %606 = vmatprep.subr.bf16.mxu0 0
    %607 = vmatpush2.bf16.msra.mxu0 %v474
    %608 = vmatprep.subr.bf16.mxu0 0
    %609 = vmatpush2.bf16.msra.mxu0 %v473
    %610 = vmatprep.subr.bf16.mxu0 0
    %611 = vmatpush2.bf16.msra.mxu0 %v472
    %612 = vmatprep.subr.bf16.mxu0 0
    %613 = vmatpush2.bf16.msra.mxu0 %v471
    %614 = vmatprep.subr.bf16.mxu0 0
    %615 = vmatpush2.bf16.msra.mxu0 %v470
    %616 = vmatprep.subr.bf16.mxu0 0
    %617 = vmatpush2.bf16.msra.mxu0 %v469
    %618 = vmatprep.subr.bf16.mxu0 0
    %619 = vmatpush2.bf16.msra.mxu0 %v468
    %620 = vmatprep.mubr.bf16.mxu0 %v65
    %621 = vmatmul.mubr.bf16.gmra.mxu0 %v64
    %v622 = vpop.f32.mrf.mxu0
    %v623 = vadd.f32 %v203, %v622
    %v624 = vpop.f32.mrf.mxu0
    %v625 = vpop.f32.mrf.mxu0
    %v626 = vpop.f32.mrf.mxu0
    %627 = vdwg.mxu0
    %628 = vmatprep.subr.bf16.mxu0 0
    %629 = vmatpush1.bf16.msra.mxu0 %v483
    %630 = vmatprep.subr.bf16.mxu0 0
    %631 = vmatpush1.bf16.msra.mxu0 %v482
    %632 = vmatprep.subr.bf16.mxu0 0
    %633 = vmatpush1.bf16.msra.mxu0 %v481
    %634 = vmatprep.subr.bf16.mxu0 0
    %635 = vmatpush1.bf16.msra.mxu0 %v480
    %636 = vmatprep.subr.bf16.mxu0 0
    %637 = vmatpush1.bf16.msra.mxu0 %v479
    %638 = vmatprep.subr.bf16.mxu0 0
    %639 = vmatpush1.bf16.msra.mxu0 %v478
    %640 = vmatprep.subr.bf16.mxu0 0
    %641 = vmatpush1.bf16.msra.mxu0 %v477
    %642 = vmatprep.subr.bf16.mxu0 0
    %643 = vmatpush1.bf16.msra.mxu0 %v476
    %644 = vmatprep.subr.bf16.mxu0 0
    %645 = vmatpush2.bf16.msra.mxu0 %v491
    %646 = vmatprep.subr.bf16.mxu0 0
    %647 = vmatpush2.bf16.msra.mxu0 %v490
    %648 = vmatprep.subr.bf16.mxu0 0
    %649 = vmatpush2.bf16.msra.mxu0 %v489
    %650 = vmatprep.subr.bf16.mxu0 0
    %651 = vmatpush2.bf16.msra.mxu0 %v488
    %652 = vmatprep.subr.bf16.mxu0 0
    %653 = vmatpush2.bf16.msra.mxu0 %v487
    %654 = vmatprep.subr.bf16.mxu0 0
    %655 = vmatpush2.bf16.msra.mxu0 %v486
    %656 = vmatprep.subr.bf16.mxu0 0
    %657 = vmatpush2.bf16.msra.mxu0 %v485
    %658 = vmatprep.subr.bf16.mxu0 0
    %659 = vmatpush2.bf16.msra.mxu0 %v484
    %660 = vmatprep.mubr.bf16.mxu0 %v67
    %661 = vmatmul.mubr.bf16.gmra.mxu0 %v66
    %v662 = vpop.f32.mrf.mxu0
    %v663 = vadd.f32 %v623, %v662
    %v664 = vpop.f32.mrf.mxu0
    %v665 = vpop.f32.mrf.mxu0
    %v666 = vpop.f32.mrf.mxu0
    %667 = vdwg.mxu0
    %668 = vmatprep.subr.bf16.mxu0 0
    %669 = vmatpush1.bf16.msra.mxu0 %v499
    %670 = vmatprep.subr.bf16.mxu0 0
    %671 = vmatpush1.bf16.msra.mxu0 %v498
    %672 = vmatprep.subr.bf16.mxu0 0
    %673 = vmatpush1.bf16.msra.mxu0 %v497
    %674 = vmatprep.subr.bf16.mxu0 0
    %675 = vmatpush1.bf16.msra.mxu0 %v496
    %676 = vmatprep.subr.bf16.mxu0 0
    %677 = vmatpush1.bf16.msra.mxu0 %v495
    %678 = vmatprep.subr.bf16.mxu0 0
    %679 = vmatpush1.bf16.msra.mxu0 %v494
    %680 = vmatprep.subr.bf16.mxu0 0
    %681 = vmatpush1.bf16.msra.mxu0 %v493
    %682 = vmatprep.subr.bf16.mxu0 0
    %683 = vmatpush1.bf16.msra.mxu0 %v492
    %684 = vmatprep.subr.bf16.mxu0 0
    %685 = vmatpush2.bf16.msra.mxu0 %v507
    %686 = vmatprep.subr.bf16.mxu0 0
    %687 = vmatpush2.bf16.msra.mxu0 %v506
    %688 = vmatprep.subr.bf16.mxu0 0
    %689 = vmatpush2.bf16.msra.mxu0 %v505
    %690 = vmatprep.subr.bf16.mxu0 0
    %691 = vmatpush2.bf16.msra.mxu0 %v504
    %692 = vmatprep.subr.bf16.mxu0 0
    %693 = vmatpush2.bf16.msra.mxu0 %v503
    %694 = vmatprep.subr.bf16.mxu0 0
    %695 = vmatpush2.bf16.msra.mxu0 %v502
    %696 = vmatprep.subr.bf16.mxu0 0
    %697 = vmatpush2.bf16.msra.mxu0 %v501
    %698 = vmatprep.subr.bf16.mxu0 0
    %699 = vmatpush2.bf16.msra.mxu0 %v500
    %700 = vmatprep.mubr.bf16.mxu0 %v69
    %701 = vmatmul.mubr.bf16.gmra.mxu0 %v68
    %v702 = vpop.f32.mrf.mxu0
    %v703 = vadd.f32 %v663, %v702
    %v704 = vpop.f32.mrf.mxu0
    %v705 = vpop.f32.mrf.mxu0
    %v706 = vpop.f32.mrf.mxu0
    %707 = vdwg.mxu0
    %708 = vmatprep.subr.bf16.mxu0 0
    %709 = vmatpush1.bf16.msra.mxu0 %v515
    %710 = vmatprep.subr.bf16.mxu0 0
    %711 = vmatpush1.bf16.msra.mxu0 %v514
    %712 = vmatprep.subr.bf16.mxu0 0
    %713 = vmatpush1.bf16.msra.mxu0 %v513
    %714 = vmatprep.subr.bf16.mxu0 0
    %715 = vmatpush1.bf16.msra.mxu0 %v512
    %716 = vmatprep.subr.bf16.mxu0 0
    %717 = vmatpush1.bf16.msra.mxu0 %v511
    %718 = vmatprep.subr.bf16.mxu0 0
    %719 = vmatpush1.bf16.msra.mxu0 %v510
    %720 = vmatprep.subr.bf16.mxu0 0
    %721 = vmatpush1.bf16.msra.mxu0 %v509
    %722 = vmatprep.subr.bf16.mxu0 0
    %723 = vmatpush1.bf16.msra.mxu0 %v508
    %724 = vmatprep.subr.bf16.mxu0 0
    %725 = vmatpush2.bf16.msra.mxu0 %v523
    %726 = vmatprep.subr.bf16.mxu0 0
    %727 = vmatpush2.bf16.msra.mxu0 %v522
    %728 = vmatprep.subr.bf16.mxu0 0
    %729 = vmatpush2.bf16.msra.mxu0 %v521
    %730 = vmatprep.subr.bf16.mxu0 0
    %731 = vmatpush2.bf16.msra.mxu0 %v520
    %732 = vmatprep.subr.bf16.mxu0 0
    %733 = vmatpush2.bf16.msra.mxu0 %v519
    %734 = vmatprep.subr.bf16.mxu0 0
    %735 = vmatpush2.bf16.msra.mxu0 %v518
    %736 = vmatprep.subr.bf16.mxu0 0
    %737 = vmatpush2.bf16.msra.mxu0 %v517
    %738 = vmatprep.subr.bf16.mxu0 0
    %739 = vmatpush2.bf16.msra.mxu0 %v516
    %740 = vmatprep.mubr.bf16.mxu0 %v71
    %741 = vmatmul.mubr.bf16.gmra.mxu0 %v70
    %v742 = vpop.f32.mrf.mxu0
    %v743 = vadd.f32 %v703, %v742
    %v744 = vpop.f32.mrf.mxu0
    %v745 = vpop.f32.mrf.mxu0
    %v746 = vpop.f32.mrf.mxu0
    %747 = vdwg.mxu0
    %v748 = vmax.f32 %v743, 0.0
    %v749 = vpack.c.bf16 %v748, %v748
    %v750 = vld [vmem:[%s2] sm:$0xf]
    %v751 = vld [vmem:[%s2 + $0x4] sm:$0xf]
    %v752 = vld [vmem:[%s2 + $0x8] sm:$0xf]
    %v753 = vld [vmem:[%s2 + $0xc] sm:$0xf]
    %v754 = vld [vmem:[%s2 + $0x10] sm:$0xf]
    %v755 = vld [vmem:[%s2 + $0x14] sm:$0xf]
    %v756 = vld [vmem:[%s2 + $0x18] sm:$0xf]
    %v757 = vld [vmem:[%s2 + $0x1c] sm:$0xf]
    %v758 = vld [vmem:[%s2 + $0x20] sm:$0xf]
    %v759 = vld [vmem:[%s2 + $0x24] sm:$0xf]
    %v760 = vld [vmem:[%s2 + $0x28] sm:$0xf]
    %v761 = vld [vmem:[%s2 + $0x2c] sm:$0xf]
    %v762 = vld [vmem:[%s2 + $0x30] sm:$0xf]
    %v763 = vld [vmem:[%s2 + $0x34] sm:$0xf]
    %v764 = vld [vmem:[%s2 + $0x38] sm:$0xf]
    %v765 = vld [vmem:[%s2 + $0x3c] sm:$0xf]
    %v766 = vlaneseq
    %v767 = vshrl.u32 %v766, 7
    %v768 = vsub.s32 1, %v767
    %v769 = vrot.slane %v55, %v768
    %v786 = vunpack.c.l.b16 %v750
    %v787 = vunpack.c.l.b16 %v751
    %v788 = vunpack.c.l.b16 %v752
    %v789 = vunpack.c.l.b16 %v753
    %v790 = vunpack.c.l.b16 %v754
    %v791 = vunpack.c.l.b16 %v755
    %v792 = vunpack.c.l.b16 %v756
    %v793 = vunpack.c.l.b16 %v757
    %v794 = vunpack.c.l.b16 %v758
    %v795 = vunpack.c.l.b16 %v759
    %v796 = vunpack.c.l.b16 %v760
    %v797 = vunpack.c.l.b16 %v761
    %v798 = vunpack.c.l.b16 %v762
    %v799 = vunpack.c.l.b16 %v763
    %v800 = vunpack.c.l.b16 %v764
    %v801 = vunpack.c.l.b16 %v765
    %v802 = vpack.c.b16 %v787, %v786
    %v803 = vpack.c.b16 %v789, %v788
    %v804 = vpack.c.b16 %v791, %v790
    %v805 = vpack.c.b16 %v793, %v792
    %v806 = vpack.c.b16 %v795, %v794
    %v807 = vpack.c.b16 %v797, %v796
    %v808 = vpack.c.b16 %v799, %v798
    %v809 = vpack.c.b16 %v801, %v800
    %818 = vmatprep.subr.bf16.mxu0 0
    %819 = vmatpush1.bf16.msra.mxu0 %v809
    %820 = vmatprep.subr.bf16.mxu0 0
    %821 = vmatpush1.bf16.msra.mxu0 %v808
    %822 = vmatprep.subr.bf16.mxu0 0
    %823 = vmatpush1.bf16.msra.mxu0 %v807
    %824 = vmatprep.subr.bf16.mxu0 0
    %825 = vmatpush1.bf16.msra.mxu0 %v806
    %826 = vmatprep.subr.bf16.mxu0 0
    %827 = vmatpush1.bf16.msra.mxu0 %v805
    %828 = vmatprep.subr.bf16.mxu0 0
    %829 = vmatpush1.bf16.msra.mxu0 %v804
    %830 = vmatprep.subr.bf16.mxu0 0
    %831 = vmatpush1.bf16.msra.mxu0 %v803
    %832 = vmatprep.subr.bf16.mxu0 0
    %833 = vmatpush1.bf16.msra.mxu0 %v802
    %834 = vmatprep.subr.bf16.mxu0 0
    %835 = vmatpush2.bf16.msra.mxu0 0
    %836 = vmatprep.subr.bf16.mxu0 0
    %837 = vmatpush2.bf16.msra.mxu0 0
    %838 = vmatprep.subr.bf16.mxu0 0
    %839 = vmatpush2.bf16.msra.mxu0 0
    %840 = vmatprep.subr.bf16.mxu0 0
    %841 = vmatpush2.bf16.msra.mxu0 0
    %842 = vmatprep.subr.bf16.mxu0 0
    %843 = vmatpush2.bf16.msra.mxu0 0
    %844 = vmatprep.subr.bf16.mxu0 0
    %845 = vmatpush2.bf16.msra.mxu0 0
    %846 = vmatprep.subr.bf16.mxu0 0
    %847 = vmatpush2.bf16.msra.mxu0 0
    %848 = vmatprep.subr.bf16.mxu0 0
    %849 = vmatpush2.bf16.msra.mxu0 0
    %850 = vmatprep.mubr.bf16.mxu0 0
    %851 = vmatmul.mubr.bf16.gmra.mxu0 %v749
    %v852 = vpop.f32.mrf.mxu0
    %v853 = vadd.f32 %v769, %v852
    %v854 = vpop.f32.mrf.mxu0
    %v855 = vpop.f32.mrf.mxu0
    %v856 = vpop.f32.mrf.mxu0
    %857 = vdwg.mxu0
    %v858 = vmax.f32 %v853, 0.0
    %v859 = vpack.c.bf16 %v858, %v858
    %v860 = vld [vmem:[%s3] sm:$0xf]
    %v861 = vld [vmem:[%s3 + $0x4] sm:$0xf]
    %v862 = vld [vmem:[%s3 + $0x8] sm:$0xf]
    %v863 = vld [vmem:[%s3 + $0xc] sm:$0xf]
    %v864 = vld [vmem:[%s3 + $0x10] sm:$0xf]
    %v865 = vld [vmem:[%s3 + $0x14] sm:$0xf]
    %v866 = vld [vmem:[%s3 + $0x18] sm:$0xf]
    %v867 = vld [vmem:[%s3 + $0x1c] sm:$0xf]
    %v868 = vld [vmem:[%s3 + $0x20] sm:$0xf]
    %v869 = vld [vmem:[%s3 + $0x24] sm:$0xf]
    %v870 = vld [vmem:[%s3 + $0x28] sm:$0xf]
    %v871 = vld [vmem:[%s3 + $0x2c] sm:$0xf]
    %v872 = vld [vmem:[%s3 + $0x30] sm:$0xf]
    %v873 = vld [vmem:[%s3 + $0x34] sm:$0xf]
    %v874 = vld [vmem:[%s3 + $0x38] sm:$0xf]
    %v875 = vld [vmem:[%s3 + $0x3c] sm:$0xf]
    %v876 = vlaneseq
    %v877 = vshrl.u32 %v876, 7
    %v878 = vsub.s32 2, %v877
    %v879 = vrot.slane %v55, %v878
    %v896 = vunpack.c.l.b16 %v860
    %v897 = vunpack.c.l.b16 %v861
    %v898 = vunpack.c.l.b16 %v862
    %v899 = vunpack.c.l.b16 %v863
    %v900 = vunpack.c.l.b16 %v864
    %v901 = vunpack.c.l.b16 %v865
    %v902 = vunpack.c.l.b16 %v866
    %v903 = vunpack.c.l.b16 %v867
    %v904 = vunpack.c.l.b16 %v868
    %v905 = vunpack.c.l.b16 %v869
    %v906 = vunpack.c.l.b16 %v870
    %v907 = vunpack.c.l.b16 %v871
    %v908 = vunpack.c.l.b16 %v872
    %v909 = vunpack.c.l.b16 %v873
    %v910 = vunpack.c.l.b16 %v874
    %v911 = vunpack.c.l.b16 %v875
    %v912 = vpack.c.b16 %v897, %v896
    %v913 = vpack.c.b16 %v899, %v898
    %v914 = vpack.c.b16 %v901, %v900
    %v915 = vpack.c.b16 %v903, %v902
    %v916 = vpack.c.b16 %v905, %v904
    %v917 = vpack.c.b16 %v907, %v906
    %v918 = vpack.c.b16 %v909, %v908
    %v919 = vpack.c.b16 %v911, %v910
    %928 = vmatprep.subr.bf16.mxu0 0
    %929 = vmatpush1.bf16.msra.mxu0 %v919
    %930 = vmatprep.subr.bf16.mxu0 0
    %931 = vmatpush1.bf16.msra.mxu0 %v918
    %932 = vmatprep.subr.bf16.mxu0 0
    %933 = vmatpush1.bf16.msra.mxu0 %v917
    %934 = vmatprep.subr.bf16.mxu0 0
    %935 = vmatpush1.bf16.msra.mxu0 %v916
    %936 = vmatprep.subr.bf16.mxu0 0
    %937 = vmatpush1.bf16.msra.mxu0 %v915
    %938 = vmatprep.subr.bf16.mxu0 0
    %939 = vmatpush1.bf16.msra.mxu0 %v914
    %940 = vmatprep.subr.bf16.mxu0 0
    %941 = vmatpush1.bf16.msra.mxu0 %v913
    %942 = vmatprep.subr.bf16.mxu0 0
    %943 = vmatpush1.bf16.msra.mxu0 %v912
    %944 = vmatprep.subr.bf16.mxu0 0
    %945 = vmatpush2.bf16.msra.mxu0 0
    %946 = vmatprep.subr.bf16.mxu0 0
    %947 = vmatpush2.bf16.msra.mxu0 0
    %948 = vmatprep.subr.bf16.mxu0 0
    %949 = vmatpush2.bf16.msra.mxu0 0
    %950 = vmatprep.subr.bf16.mxu0 0
    %951 = vmatpush2.bf16.msra.mxu0 0
    %952 = vmatprep.subr.bf16.mxu0 0
    %953 = vmatpush2.bf16.msra.mxu0 0
    %954 = vmatprep.subr.bf16.mxu0 0
    %955 = vmatpush2.bf16.msra.mxu0 0
    %956 = vmatprep.subr.bf16.mxu0 0
    %957 = vmatpush2.bf16.msra.mxu0 0
    %958 = vmatprep.subr.bf16.mxu0 0
    %959 = vmatpush2.bf16.msra.mxu0 0
    %960 = vmatprep.mubr.bf16.mxu0 0
    %961 = vmatmul.mubr.bf16.gmra.mxu0 %v859
    %v962 = vpop.f32.mrf.mxu0
    %v963 = vadd.f32 %v879, %v962
    %v964 = vpop.f32.mrf.mxu0
    %v965 = vpop.f32.mrf.mxu0
    %v966 = vpop.f32.mrf.mxu0
    %967 = vdwg.mxu0
    %v968 = vmax.f32 %v963, 0.0
    %v969 = vpack.c.bf16 %v968, %v968
    %v970 = vld [vmem:[%s4] sm:$0xf]
    %v971 = vld [vmem:[%s4 + $0x4] sm:$0xf]
    %v972 = vld [vmem:[%s4 + $0x8] sm:$0xf]
    %v973 = vld [vmem:[%s4 + $0xc] sm:$0xf]
    %v974 = vld [vmem:[%s4 + $0x10] sm:$0xf]
    %v975 = vld [vmem:[%s4 + $0x14] sm:$0xf]
    %v976 = vld [vmem:[%s4 + $0x18] sm:$0xf]
    %v977 = vld [vmem:[%s4 + $0x1c] sm:$0xf]
    %v978 = vld [vmem:[%s4 + $0x20] sm:$0xf]
    %v979 = vld [vmem:[%s4 + $0x24] sm:$0xf]
    %v980 = vld [vmem:[%s4 + $0x28] sm:$0xf]
    %v981 = vld [vmem:[%s4 + $0x2c] sm:$0xf]
    %v982 = vld [vmem:[%s4 + $0x30] sm:$0xf]
    %v983 = vld [vmem:[%s4 + $0x34] sm:$0xf]
    %v984 = vld [vmem:[%s4 + $0x38] sm:$0xf]
    %v985 = vld [vmem:[%s4 + $0x3c] sm:$0xf]
    %v986 = vlaneseq
    %v987 = vshrl.u32 %v986, 7
    %v988 = vsub.s32 3, %v987
    %v989 = vrot.slane %v55, %v988
    %v1006 = vunpack.c.l.b16 %v970
    %v1007 = vunpack.c.l.b16 %v971
    %v1008 = vunpack.c.l.b16 %v972
    %v1009 = vunpack.c.l.b16 %v973
    %v1010 = vunpack.c.l.b16 %v974
    %v1011 = vunpack.c.l.b16 %v975
    %v1012 = vunpack.c.l.b16 %v976
    %v1013 = vunpack.c.l.b16 %v977
    %v1014 = vunpack.c.l.b16 %v978
    %v1015 = vunpack.c.l.b16 %v979
    %v1016 = vunpack.c.l.b16 %v980
    %v1017 = vunpack.c.l.b16 %v981
    %v1018 = vunpack.c.l.b16 %v982
    %v1019 = vunpack.c.l.b16 %v983
    %v1020 = vunpack.c.l.b16 %v984
    %v1021 = vunpack.c.l.b16 %v985
    %v1022 = vpack.c.b16 %v1007, %v1006
    %v1023 = vpack.c.b16 %v1009, %v1008
    %v1024 = vpack.c.b16 %v1011, %v1010
    %v1025 = vpack.c.b16 %v1013, %v1012
    %v1026 = vpack.c.b16 %v1015, %v1014
    %v1027 = vpack.c.b16 %v1017, %v1016
    %v1028 = vpack.c.b16 %v1019, %v1018
    %v1029 = vpack.c.b16 %v1021, %v1020
    %1038 = vmatprep.subr.bf16.mxu0 0
    %1039 = vmatpush1.bf16.msra.mxu0 %v1029
    %1040 = vmatprep.subr.bf16.mxu0 0
    %1041 = vmatpush1.bf16.msra.mxu0 %v1028
    %1042 = vmatprep.subr.bf16.mxu0 0
    %1043 = vmatpush1.bf16.msra.mxu0 %v1027
    %1044 = vmatprep.subr.bf16.mxu0 0
    %1045 = vmatpush1.bf16.msra.mxu0 %v1026
    %1046 = vmatprep.subr.bf16.mxu0 0
    %1047 = vmatpush1.bf16.msra.mxu0 %v1025
    %1048 = vmatprep.subr.bf16.mxu0 0
    %1049 = vmatpush1.bf16.msra.mxu0 %v1024
    %1050 = vmatprep.subr.bf16.mxu0 0
    %1051 = vmatpush1.bf16.msra.mxu0 %v1023
    %1052 = vmatprep.subr.bf16.mxu0 0
    %1053 = vmatpush1.bf16.msra.mxu0 %v1022
    %1054 = vmatprep.subr.bf16.mxu0 0
    %1055 = vmatpush2.bf16.msra.mxu0 0
    %1056 = vmatprep.subr.bf16.mxu0 0
    %1057 = vmatpush2.bf16.msra.mxu0 0
    %1058 = vmatprep.subr.bf16.mxu0 0
    %1059 = vmatpush2.bf16.msra.mxu0 0
    %1060 = vmatprep.subr.bf16.mxu0 0
    %1061 = vmatpush2.bf16.msra.mxu0 0
    %1062 = vmatprep.subr.bf16.mxu0 0
    %1063 = vmatpush2.bf16.msra.mxu0 0
    %1064 = vmatprep.subr.bf16.mxu0 0
    %1065 = vmatpush2.bf16.msra.mxu0 0
    %1066 = vmatprep.subr.bf16.mxu0 0
    %1067 = vmatpush2.bf16.msra.mxu0 0
    %1068 = vmatprep.subr.bf16.mxu0 0
    %1069 = vmatpush2.bf16.msra.mxu0 0
    %1070 = vmatprep.mubr.bf16.mxu0 0
    %1071 = vmatmul.mubr.bf16.gmra.mxu0 %v969
    %v1072 = vpop.f32.mrf.mxu0
    %v1073 = vadd.f32 %v989, %v1072
    %v1074 = vpop.f32.mrf.mxu0
    %v1075 = vpop.f32.mrf.mxu0
    %v1076 = vpop.f32.mrf.mxu0
    %1077 = vdwg.mxu0
    %v1078 = vmax.f32 %v1073, 0.0
    %v1079 = vpack.c.bf16 %v1078, %v1078
    %v1080 = vld [vmem:[#allocation4] sm:$0xf]
    %v1081 = vld [vmem:[#allocation4 + $0x4] sm:$0xf]
    %v1082 = vld [vmem:[#allocation4 + $0x8] sm:$0xf]
    %v1083 = vld [vmem:[#allocation4 + $0xc] sm:$0xf]
    %v1084 = vld [vmem:[#allocation4 + $0x10] sm:$0xf]
    %v1085 = vld [vmem:[#allocation4 + $0x14] sm:$0xf]
    %v1086 = vld [vmem:[#allocation4 + $0x18] sm:$0xf]
    %v1087 = vld [vmem:[#allocation4 + $0x1c] sm:$0xf]
    %v1088 = vld [vmem:[#allocation4 + $0x20] sm:$0xf]
    %v1089 = vld [vmem:[#allocation4 + $0x24] sm:$0xf]
    %v1090 = vld [vmem:[#allocation4 + $0x28] sm:$0xf]
    %v1091 = vld [vmem:[#allocation4 + $0x2c] sm:$0xf]
    %v1092 = vld [vmem:[#allocation4 + $0x30] sm:$0xf]
    %v1093 = vld [vmem:[#allocation4 + $0x34] sm:$0xf]
    %v1094 = vld [vmem:[#allocation4 + $0x38] sm:$0xf]
    %v1095 = vld [vmem:[#allocation4 + $0x3c] sm:$0xf]
    %v1096 = vlaneseq
    %v1097 = vshrl.u32 %v1096, 7
    %v1098 = vsub.s32 4, %v1097
    %v1099 = vrot.slane %v55, %v1098
    %v1116 = vunpack.c.l.b16 %v1080
    %v1117 = vunpack.c.l.b16 %v1081
    %v1118 = vunpack.c.l.b16 %v1082
    %v1119 = vunpack.c.l.b16 %v1083
    %v1120 = vunpack.c.l.b16 %v1084
    %v1121 = vunpack.c.l.b16 %v1085
    %v1122 = vunpack.c.l.b16 %v1086
    %v1123 = vunpack.c.l.b16 %v1087
    %v1124 = vunpack.c.l.b16 %v1088
    %v1125 = vunpack.c.l.b16 %v1089
    %v1126 = vunpack.c.l.b16 %v1090
    %v1127 = vunpack.c.l.b16 %v1091
    %v1128 = vunpack.c.l.b16 %v1092
    %v1129 = vunpack.c.l.b16 %v1093
    %v1130 = vunpack.c.l.b16 %v1094
    %v1131 = vunpack.c.l.b16 %v1095
    %v1132 = vpack.c.b16 %v1117, %v1116
    %v1133 = vpack.c.b16 %v1119, %v1118
    %v1134 = vpack.c.b16 %v1121, %v1120
    %v1135 = vpack.c.b16 %v1123, %v1122
    %v1136 = vpack.c.b16 %v1125, %v1124
    %v1137 = vpack.c.b16 %v1127, %v1126
    %v1138 = vpack.c.b16 %v1129, %v1128
    %v1139 = vpack.c.b16 %v1131, %v1130
    %1148 = vmatprep.subr.bf16.mxu0 0
    %1149 = vmatpush1.bf16.msra.mxu0 %v1139
    %1150 = vmatprep.subr.bf16.mxu0 0
    %1151 = vmatpush1.bf16.msra.mxu0 %v1138
    %1152 = vmatprep.subr.bf16.mxu0 0
    %1153 = vmatpush1.bf16.msra.mxu0 %v1137
    %1154 = vmatprep.subr.bf16.mxu0 0
    %1155 = vmatpush1.bf16.msra.mxu0 %v1136
    %1156 = vmatprep.subr.bf16.mxu0 0
    %1157 = vmatpush1.bf16.msra.mxu0 %v1135
    %1158 = vmatprep.subr.bf16.mxu0 0
    %1159 = vmatpush1.bf16.msra.mxu0 %v1134
    %1160 = vmatprep.subr.bf16.mxu0 0
    %1161 = vmatpush1.bf16.msra.mxu0 %v1133
    %1162 = vmatprep.subr.bf16.mxu0 0
    %1163 = vmatpush1.bf16.msra.mxu0 %v1132
    %1164 = vmatprep.subr.bf16.mxu0 0
    %1165 = vmatpush2.bf16.msra.mxu0 0
    %1166 = vmatprep.subr.bf16.mxu0 0
    %1167 = vmatpush2.bf16.msra.mxu0 0
    %1168 = vmatprep.subr.bf16.mxu0 0
    %1169 = vmatpush2.bf16.msra.mxu0 0
    %1170 = vmatprep.subr.bf16.mxu0 0
    %1171 = vmatpush2.bf16.msra.mxu0 0
    %1172 = vmatprep.subr.bf16.mxu0 0
    %1173 = vmatpush2.bf16.msra.mxu0 0
    %1174 = vmatprep.subr.bf16.mxu0 0
    %1175 = vmatpush2.bf16.msra.mxu0 0
    %1176 = vmatprep.subr.bf16.mxu0 0
    %1177 = vmatpush2.bf16.msra.mxu0 0
    %1178 = vmatprep.subr.bf16.mxu0 0
    %1179 = vmatpush2.bf16.msra.mxu0 0
    %1180 = vmatprep.mubr.bf16.mxu0 0
    %1181 = vmatmul.mubr.bf16.gmra.mxu0 %v1079
    %v1182 = vpop.f32.mrf.mxu0
    %v1183 = vadd.f32 %v1099, %v1182
    %v1184 = vpop.f32.mrf.mxu0
    %v1185 = vpop.f32.mrf.mxu0
    %v1186 = vpop.f32.mrf.mxu0
    %1187 = vdwg.mxu0
    %v1188 = vpack.c.bf16 %v1183, %v1183
    %1189 = vst [vmem:[%s7] sm:$0xf] %v1188
    // Predicated region
    $region38: #{_mlp_forward_impl.1} parent=1 // pred_check
      _
    $region39: #{_mlp_forward_impl.1} parent=1 // pred_check_branch
      %1191 = sbr.rel (0) target = $region41
    $region40: #{_mlp_forward_impl.1} parent=1 // pred_region
      _
    $region41: #{_mlp_forward_impl.1} parent=1 // pred_fallthru
      _
    // Predicated region
    $region42: #{_mlp_forward_impl.1} parent=1 // pred_check
      _
    $region43: #{_mlp_forward_impl.1} parent=1 // pred_check_branch
      %1193 = sbr.rel (0) target = $region45
    $region44: #{_mlp_forward_impl.1} parent=1 // pred_region
      _
    $region45: #{_mlp_forward_impl.1} parent=1 // pred_fallthru
      _
    %1194 = vsyncpa [#allocation3], 1
    %1195 = vsyncpa [#allocation5], 1

// kernel: _mlp_forward_impl.1
$region0: #{_mlp_forward_impl.1}
  #allocation0 [shape = 'u32[]', space=smem, size = 0x4, offset = 0x4, fixed_abs, tag = 'smem constant byte address 0x4 - core index']
  #allocation1 [shape = 'u32[144,128]{1,0:T(1,128)}', space=vmem, size = 0x12000, scoped, tag = 'internal scratch']
  %s0 = inlined_call_operand.vmem [shape: f32[8,1024], index: 0, kind: input, shape index: {}]
  %s1 = inlined_call_operand.hbm [shape: bf16[1024,128], index: 1, kind: input, shape index: {}]
  %s2 = inlined_call_operand.vmem [shape: bf16[128,128], index: 2, kind: input, shape index: {}]
  %s3 = inlined_call_operand.vmem [shape: bf16[128,128], index: 3, kind: input, shape index: {}]
  %s4 = inlined_call_operand.vmem [shape: bf16[128,128], index: 4, kind: input, shape index: {}]
  %s5 = inlined_call_operand.hbm [shape: bf16[128,128], index: 5, kind: input, shape index: {}]
  %s6 = inlined_call_operand.vmem [shape: f32[8,128], index: 6, kind: input, shape index: {}]
  %s7 = inlined_call_operand.vmem [shape: bf16[8,128], index: 7, kind: output, shape index: {}]
  %s8 = sld [smem:[#allocation0]]
  $region46: #{_mlp_forward_impl.1} parent=0
    _
  %s10 = ssub.s32 1, %s8
  %s11 = scalar_select 0, %s10, %s8
  $region1: #{_mlp_forward_impl.1} parent=0
    #allocation2 [shape = 'u8[262144]{0}', space=vmem, size = 0x40000, scoped, tag = 'input window, operand 1, single buffered']
    #allocation3 [shape = 's32[1]{0}', space=sflag, size = 0x4, scoped, tag = 'scoped memory for _mlp_forward_impl.1']
    #allocation4 [shape = 'u8[32768]{0}', space=vmem, size = 0x8000, scoped, tag = 'input window, operand 5, single buffered']
    #allocation5 [shape = 's32[1]{0}', space=sflag, size = 0x4, scoped, tag = 'scoped memory for _mlp_forward_impl.1']
    %12 = vsyncpa [#allocation3], 0
    %13 = vsyncpa [#allocation5], 0
    // Predicated region
    $region2: #{_mlp_forward_impl.1} parent=1 // pred_check
      _
    $region3: #{_mlp_forward_impl.1} parent=1 // pred_check_branch
      %15 = sbr.rel (0) target = $region5
    $region4: #{_mlp_forward_impl.1} parent=1 // pred_region
      _
    $region5: #{_mlp_forward_impl.1} parent=1 // pred_fallthru
      _
    // Predicated region
    $region6: #{_mlp_forward_impl.1} parent=1 // pred_check
      _
    $region7: #{_mlp_forward_impl.1} parent=1 // pred_check_branch
      %17 = sbr.rel (0) target = $region9
    $region8: #{_mlp_forward_impl.1} parent=1 // pred_region
      %s19 = ssub.s32 8192, 8192
      %20 = vsyncadd [#allocation3], %s19
      %s21 = sshll.u32 [#allocation2], 4
      %s22 = int_to_ptr.vmem [resolvable:$true] %s21
      %27 = dma.hbm_to_vmem [thread:$0]  %s1, 8192, %s22, [#allocation3], 64, 64, 4
    $region9: #{_mlp_forward_impl.1} parent=1 // pred_fallthru
      _
    // Predicated region
    $region10: #{_mlp_forward_impl.1} parent=1 // pred_check
      _
    $region11: #{_mlp_forward_impl.1} parent=1 // pred_check_branch
      %29 = sbr.rel (0) target = $region13
    $region12: #{_mlp_forward_impl.1} parent=1 // pred_region
      _
    $region13: #{_mlp_forward_impl.1} parent=1 // pred_fallthru
      _
    // Predicated region
    $region14: #{_mlp_forward_impl.1} parent=1 // pred_check
      _
    $region15: #{_mlp_forward_impl.1} parent=1 // pred_check_branch
      %31 = sbr.rel (0) target = $region17
    $region16: #{_mlp_forward_impl.1} parent=1 // pred_region
      _
    $region17: #{_mlp_forward_impl.1} parent=1 // pred_fallthru
      _
    // Predicated region
    $region18: #{_mlp_forward_impl.1} parent=1 // pred_check
      _
    $region19: #{_mlp_forward_impl.1} parent=1 // pred_check_branch
      %33 = sbr.rel (0) target = $region21
    $region20: #{_mlp_forward_impl.1} parent=1 // pred_region
      _
    $region21: #{_mlp_forward_impl.1} parent=1 // pred_fallthru
      _
    // Predicated region
    $region22: #{_mlp_forward_impl.1} parent=1 // pred_check
      _
    $region23: #{_mlp_forward_impl.1} parent=1 // pred_check_branch
      %35 = sbr.rel (0) target = $region25
    $region24: #{_mlp_forward_impl.1} parent=1 // pred_region
      %s37 = ssub.s32 1024, 1024
      %38 = vsyncadd [#allocation5], %s37
      %s39 = sshll.u32 [#allocation4], 4
      %s40 = int_to_ptr.vmem [resolvable:$true] %s39
      %45 = dma.hbm_to_vmem [thread:$0]  %s5, 1024, %s40, [#allocation5], 64, 64, 4
    $region25: #{_mlp_forward_impl.1} parent=1 // pred_fallthru
      _
    // Predicated region
    $region26: #{_mlp_forward_impl.1} parent=1 // pred_check
      _
    $region27: #{_mlp_forward_impl.1} parent=1 // pred_check_branch
      %47 = sbr.rel (0) target = $region29
    $region28: #{_mlp_forward_impl.1} parent=1 // pred_region
      _
    $region29: #{_mlp_forward_impl.1} parent=1 // pred_fallthru
      _
    // Predicated region
    $region30: #{_mlp_forward_impl.1} parent=1 // pred_check
      _
    $region31: #{_mlp_forward_impl.1} parent=1 // pred_check_branch
      %49 = sbr.rel (0) target = $region33
    $region32: #{_mlp_forward_impl.1} parent=1 // pred_region
      %50 = dma.done [#allocation3], 8192
    $region33: #{_mlp_forward_impl.1} parent=1 // pred_fallthru
      _
    // Predicated region
    $region34: #{_mlp_forward_impl.1} parent=1 // pred_check
      _
    $region35: #{_mlp_forward_impl.1} parent=1 // pred_check_branch
      %52 = sbr.rel (0) target = $region37
    $region36: #{_mlp_forward_impl.1} parent=1 // pred_region
      %53 = dma.done [#allocation5], 1024
    $region37: #{_mlp_forward_impl.1} parent=1 // pred_fallthru
      _
    %v55 = vld [vmem:[%s6] sm:$0xff]
    %v56 = vld [vmem:[%s0] sm:$0xff]
    %v57 = vld [vmem:[%s0 + $0x8] sm:$0xff]
    %v58 = vld [vmem:[%s0 + $0x10] sm:$0xff]
    %v59 = vld [vmem:[%s0 + $0x18] sm:$0xff]
    %v60 = vld [vmem:[%s0 + $0x20] sm:$0xff]
    %v61 = vld [vmem:[%s0 + $0x28] sm:$0xff]
    %v62 = vld [vmem:[%s0 + $0x30] sm:$0xff]
    %v63 = vld [vmem:[%s0 + $0x38] sm:$0xff]
    %v64 = vpack.c.bf16 %v56, %v56
    %v65 = vpack.c.bf16 %v57, %v57
    %v66 = vpack.c.bf16 %v58, %v58
    %v67 = vpack.c.bf16 %v59, %v59
    %v68 = vpack.c.bf16 %v60, %v60
    %v69 = vpack.c.bf16 %v61, %v61
    %v70 = vpack.c.bf16 %v62, %v62
    %v71 = vpack.c.bf16 %v63, %v63
    %v72 = vld [vmem:[#allocation2] sm:$0xf]
    %v73 = vld [vmem:[#allocation2 + $0x4] sm:$0xf]
    %v74 = vld [vmem:[#allocation2 + $0x8] sm:$0xf]
    %v75 = vld [vmem:[#allocation2 + $0xc] sm:$0xf]
    %v76 = vld [vmem:[#allocation2 + $0x10] sm:$0xf]
    %v77 = vld [vmem:[#allocation2 + $0x14] sm:$0xf]
    %v78 = vld [vmem:[#allocation2 + $0x18] sm:$0xf]
    %v79 = vld [vmem:[#allocation2 + $0x1c] sm:$0xf]
    %v80 = vld [vmem:[#allocation2 + $0x20] sm:$0xf]
    %v81 = vld [vmem:[#allocation2 + $0x24] sm:$0xf]
    %v82 = vld [vmem:[#allocation2 + $0x28] sm:$0xf]
    %v83 = vld [vmem:[#allocation2 + $0x2c] sm:$0xf]
    %v84 = vld [vmem:[#allocation2 + $0x30] sm:$0xf]
    %v85 = vld [vmem:[#allocation2 + $0x34] sm:$0xf]
    %v86 = vld [vmem:[#allocation2 + $0x38] sm:$0xf]
    %v87 = vld [vmem:[#allocation2 + $0x3c] sm:$0xf]
    %v88 = vld [vmem:[#allocation2 + $0x40] sm:$0xf]
    %v89 = vld [vmem:[#allocation2 + $0x44] sm:$0xf]
    %v90 = vld [vmem:[#allocation2 + $0x48] sm:$0xf]
    %v91 = vld [vmem:[#allocation2 + $0x4c] sm:$0xf]
    %v92 = vld [vmem:[#allocation2 + $0x50] sm:$0xf]
    %v93 = vld [vmem:[#allocation2 + $0x54] sm:$0xf]
    %v94 = vld [vmem:[#allocation2 + $0x58] sm:$0xf]
    %v95 = vld [vmem:[#allocation2 + $0x5c] sm:$0xf]
    %v96 = vld [vmem:[#allocation2 + $0x60] sm:$0xf]
    %v97 = vld [vmem:[#allocation2 + $0x64] sm:$0xf]
    %v98 = vld [vmem:[#allocation2 + $0x68] sm:$0xf]
    %v99 = vld [vmem:[#allocation2 + $0x6c] sm:$0xf]
    %v100 = vld [vmem:[#allocation2 + $0x70] sm:$0xf]
    %v101 = vld [vmem:[#allocation2 + $0x74] sm:$0xf]
    %v102 = vld [vmem:[#allocation2 + $0x78] sm:$0xf]
    %v103 = vld [vmem:[#allocation2 + $0x7c] sm:$0xf]
    %v104 = vld [vmem:[#allocation2 + $0x80] sm:$0xf]
    %v105 = vld [vmem:[#allocation2 + $0x84] sm:$0xf]
    %v106 = vld [vmem:[#allocation2 + $0x88] sm:$0xf]
    %v107 = vld [vmem:[#allocation2 + $0x8c] sm:$0xf]
    %v108 = vld [vmem:[#allocation2 + $0x90] sm:$0xf]
    %v109 = vld [vmem:[#allocation2 + $0x94] sm:$0xf]
    %v110 = vld [vmem:[#allocation2 + $0x98] sm:$0xf]
    %v111 = vld [vmem:[#allocation2 + $0x9c] sm:$0xf]
    %v112 = vld [vmem:[#allocation2 + $0xa0] sm:$0xf]
    %v113 = vld [vmem:[#allocation2 + $0xa4] sm:$0xf]
    %v114 = vld [vmem:[#allocation2 + $0xa8] sm:$0xf]
    %v115 = vld [vmem:[#allocation2 + $0xac] sm:$0xf]
    %v116 = vld [vmem:[#allocation2 + $0xb0] sm:$0xf]
    %v117 = vld [vmem:[#allocation2 + $0xb4] sm:$0xf]
    %v118 = vld [vmem:[#allocation2 + $0xb8] sm:$0xf]
    %v119 = vld [vmem:[#allocation2 + $0xbc] sm:$0xf]
    %v120 = vld [vmem:[#allocation2 + $0xc0] sm:$0xf]
    %v121 = vld [vmem:[#allocation2 + $0xc4] sm:$0xf]
    %v122 = vld [vmem:[#allocation2 + $0xc8] sm:$0xf]
    %v123 = vld [vmem:[#allocation2 + $0xcc] sm:$0xf]
    %v124 = vld [vmem:[#allocation2 + $0xd0] sm:$0xf]
    %v125 = vld [vmem:[#allocation2 + $0xd4] sm:$0xf]
    %v126 = vld [vmem:[#allocation2 + $0xd8] sm:$0xf]
    %v127 = vld [vmem:[#allocation2 + $0xdc] sm:$0xf]
    %v128 = vld [vmem:[#allocation2 + $0xe0] sm:$0xf]
    %v129 = vld [vmem:[#allocation2 + $0xe4] sm:$0xf]
    %v130 = vld [vmem:[#allocation2 + $0xe8] sm:$0xf]
    %v131 = vld [vmem:[#allocation2 + $0xec] sm:$0xf]
    %v132 = vld [vmem:[#allocation2 + $0xf0] sm:$0xf]
    %v133 = vld [vmem:[#allocation2 + $0xf4] sm:$0xf]
    %v134 = vld [vmem:[#allocation2 + $0xf8] sm:$0xf]
    %v135 = vld [vmem:[#allocation2 + $0xfc] sm:$0xf]
    %v136 = vld [vmem:[#allocation2 + $0x100] sm:$0xf]
    %v137 = vld [vmem:[#allocation2 + $0x104] sm:$0xf]
    %v138 = vld [vmem:[#allocation2 + $0x108] sm:$0xf]
    %v139 = vld [vmem:[#allocation2 + $0x10c] sm:$0xf]
    %v140 = vld [vmem:[#allocation2 + $0x110] sm:$0xf]
    %v141 = vld [vmem:[#allocation2 + $0x114] sm:$0xf]
    %v142 = vld [vmem:[#allocation2 + $0x118] sm:$0xf]
    %v143 = vld [vmem:[#allocation2 + $0x11c] sm:$0xf]
    %v144 = vld [vmem:[#allocation2 + $0x120] sm:$0xf]
    %v145 = vld [vmem:[#allocation2 + $0x124] sm:$0xf]
    %v146 = vld [vmem:[#allocation2 + $0x128] sm:$0xf]
    %v147 = vld [vmem:[#allocation2 + $0x12c] sm:$0xf]
    %v148 = vld [vmem:[#allocation2 + $0x130] sm:$0xf]
    %v149 = vld [vmem:[#allocation2 + $0x134] sm:$0xf]
    %v150 = vld [vmem:[#allocation2 + $0x138] sm:$0xf]
    %v151 = vld [vmem:[#allocation2 + $0x13c] sm:$0xf]
    %v152 = vld [vmem:[#allocation2 + $0x140] sm:$0xf]
    %v153 = vld [vmem:[#allocation2 + $0x144] sm:$0xf]
    %v154 = vld [vmem:[#allocation2 + $0x148] sm:$0xf]
    %v155 = vld [vmem:[#allocation2 + $0x14c] sm:$0xf]
    %v156 = vld [vmem:[#allocation2 + $0x150] sm:$0xf]
    %v157 = vld [vmem:[#allocation2 + $0x154] sm:$0xf]
    %v158 = vld [vmem:[#allocation2 + $0x158] sm:$0xf]
    %v159 = vld [vmem:[#allocation2 + $0x15c] sm:$0xf]
    %v160 = vld [vmem:[#allocation2 + $0x160] sm:$0xf]
    %v161 = vld [vmem:[#allocation2 + $0x164] sm:$0xf]
    %v162 = vld [vmem:[#allocation2 + $0x168] sm:$0xf]
    %v163 = vld [vmem:[#allocation2 + $0x16c] sm:$0xf]
    %v164 = vld [vmem:[#allocation2 + $0x170] sm:$0xf]
    %v165 = vld [vmem:[#allocation2 + $0x174] sm:$0xf]
    %v166 = vld [vmem:[#allocation2 + $0x178] sm:$0xf]
    %v167 = vld [vmem:[#allocation2 + $0x17c] sm:$0xf]
    %v168 = vld [vmem:[#allocation2 + $0x180] sm:$0xf]
    %v169 = vld [vmem:[#allocation2 + $0x184] sm:$0xf]
    %v170 = vld [vmem:[#allocation2 + $0x188] sm:$0xf]
    %v171 = vld [vmem:[#allocation2 + $0x18c] sm:$0xf]
    %v172 = vld [vmem:[#allocation2 + $0x190] sm:$0xf]
    %v173 = vld [vmem:[#allocation2 + $0x194] sm:$0xf]
    %v174 = vld [vmem:[#allocation2 + $0x198] sm:$0xf]
    %v175 = vld [vmem:[#allocation2 + $0x19c] sm:$0xf]
    %v176 = vld [vmem:[#allocation2 + $0x1a0] sm:$0xf]
    %v177 = vld [vmem:[#allocation2 + $0x1a4] sm:$0xf]
    %v178 = vld [vmem:[#allocation2 + $0x1a8] sm:$0xf]
    %v179 = vld [vmem:[#allocation2 + $0x1ac] sm:$0xf]
    %v180 = vld [vmem:[#allocation2 + $0x1b0] sm:$0xf]
    %v181 = vld [vmem:[#allocation2 + $0x1b4] sm:$0xf]
    %v182 = vld [vmem:[#allocation2 + $0x1b8] sm:$0xf]
    %v183 = vld [vmem:[#allocation2 + $0x1bc] sm:$0xf]
    %v184 = vld [vmem:[#allocation2 + $0x1c0] sm:$0xf]
    %v185 = vld [vmem:[#allocation2 + $0x1c4] sm:$0xf]
    %v186 = vld [vmem:[#allocation2 + $0x1c8] sm:$0xf]
    %v187 = vld [vmem:[#allocation2 + $0x1cc] sm:$0xf]
    %v188 = vld [vmem:[#allocation2 + $0x1d0] sm:$0xf]
    %v189 = vld [vmem:[#allocation2 + $0x1d4] sm:$0xf]
    %v190 = vld [vmem:[#allocation2 + $0x1d8] sm:$0xf]
    %v191 = vld [vmem:[#allocation2 + $0x1dc] sm:$0xf]
    %v192 = vld [vmem:[#allocation2 + $0x1e0] sm:$0xf]
    %v193 = vld [vmem:[#allocation2 + $0x1e4] sm:$0xf]
    %v194 = vld [vmem:[#allocation2 + $0x1e8] sm:$0xf]
    %v195 = vld [vmem:[#allocation2 + $0x1ec] sm:$0xf]
    %v196 = vld [vmem:[#allocation2 + $0x1f0] sm:$0xf]
    %v197 = vld [vmem:[#allocation2 + $0x1f4] sm:$0xf]
    %v198 = vld [vmem:[#allocation2 + $0x1f8] sm:$0xf]
    %v199 = vld [vmem:[#allocation2 + $0x1fc] sm:$0xf]
    %v200 = vlaneseq
    %v201 = vshrl.u32 %v200, 7
    %v202 = vsub.s32 0, %v201
    %v203 = vrot.slane %v55, %v202
    %v332 = vunpack.c.l.b16 %v72
    %v333 = vunpack.c.l.b16 %v73
    %v334 = vunpack.c.l.b16 %v74
    %v335 = vunpack.c.l.b16 %v75
    %v336 = vunpack.c.l.b16 %v76
    %v337 = vunpack.c.l.b16 %v77
    %v338 = vunpack.c.l.b16 %v78
    %v339 = vunpack.c.l.b16 %v79
    %v340 = vunpack.c.l.b16 %v80
    %v341 = vunpack.c.l.b16 %v81
    %v342 = vunpack.c.l.b16 %v82
    %v343 = vunpack.c.l.b16 %v83
    %v344 = vunpack.c.l.b16 %v84
    %v345 = vunpack.c.l.b16 %v85
    %v346 = vunpack.c.l.b16 %v86
    %v347 = vunpack.c.l.b16 %v87
    %v348 = vunpack.c.l.b16 %v88
    %v349 = vunpack.c.l.b16 %v89
    %v350 = vunpack.c.l.b16 %v90
    %v351 = vunpack.c.l.b16 %v91
    %v352 = vunpack.c.l.b16 %v92
    %v353 = vunpack.c.l.b16 %v93
    %v354 = vunpack.c.l.b16 %v94
    %v355 = vunpack.c.l.b16 %v95
    %v356 = vunpack.c.l.b16 %v96
    %v357 = vunpack.c.l.b16 %v97
    %v358 = vunpack.c.l.b16 %v98
    %v359 = vunpack.c.l.b16 %v99
    %v360 = vunpack.c.l.b16 %v100
    %v361 = vunpack.c.l.b16 %v101
    %v362 = vunpack.c.l.b16 %v102
    %v363 = vunpack.c.l.b16 %v103
    %v364 = vunpack.c.l.b16 %v104
    %v365 = vunpack.c.l.b16 %v105
    %v366 = vunpack.c.l.b16 %v106
    %v367 = vunpack.c.l.b16 %v107
    %v368 = vunpack.c.l.b16 %v108
    %v369 = vunpack.c.l.b16 %v109
    %v370 = vunpack.c.l.b16 %v110
    %v371 = vunpack.c.l.b16 %v111
    %v372 = vunpack.c.l.b16 %v112
    %v373 = vunpack.c.l.b16 %v113
    %v374 = vunpack.c.l.b16 %v114
    %v375 = vunpack.c.l.b16 %v115
    %v376 = vunpack.c.l.b16 %v116
    %v377 = vunpack.c.l.b16 %v117
    %v378 = vunpack.c.l.b16 %v118
    %v379 = vunpack.c.l.b16 %v119
    %v380 = vunpack.c.l.b16 %v120
    %v381 = vunpack.c.l.b16 %v121
    %v382 = vunpack.c.l.b16 %v122
    %v383 = vunpack.c.l.b16 %v123
    %v384 = vunpack.c.l.b16 %v124
    %v385 = vunpack.c.l.b16 %v125
    %v386 = vunpack.c.l.b16 %v126
    %v387 = vunpack.c.l.b16 %v127
    %v388 = vunpack.c.l.b16 %v128
    %v389 = vunpack.c.l.b16 %v129
    %v390 = vunpack.c.l.b16 %v130
    %v391 = vunpack.c.l.b16 %v131
    %v392 = vunpack.c.l.b16 %v132
    %v393 = vunpack.c.l.b16 %v133
    %v394 = vunpack.c.l.b16 %v134
    %v395 = vunpack.c.l.b16 %v135
    %v396 = vunpack.c.l.b16 %v136
    %v397 = vunpack.c.l.b16 %v137
    %v398 = vunpack.c.l.b16 %v138
    %v399 = vunpack.c.l.b16 %v139
    %v400 = vunpack.c.l.b16 %v140
    %v401 = vunpack.c.l.b16 %v141
    %v402 = vunpack.c.l.b16 %v142
    %v403 = vunpack.c.l.b16 %v143
    %v404 = vunpack.c.l.b16 %v144
    %v405 = vunpack.c.l.b16 %v145
    %v406 = vunpack.c.l.b16 %v146
    %v407 = vunpack.c.l.b16 %v147
    %v408 = vunpack.c.l.b16 %v148
    %v409 = vunpack.c.l.b16 %v149
    %v410 = vunpack.c.l.b16 %v150
    %v411 = vunpack.c.l.b16 %v151
    %v412 = vunpack.c.l.b16 %v152
    %v413 = vunpack.c.l.b16 %v153
    %v414 = vunpack.c.l.b16 %v154
    %v415 = vunpack.c.l.b16 %v155
    %v416 = vunpack.c.l.b16 %v156
    %v417 = vunpack.c.l.b16 %v157
    %v418 = vunpack.c.l.b16 %v158
    %v419 = vunpack.c.l.b16 %v159
    %v420 = vunpack.c.l.b16 %v160
    %v421 = vunpack.c.l.b16 %v161
    %v422 = vunpack.c.l.b16 %v162
    %v423 = vunpack.c.l.b16 %v163
    %v424 = vunpack.c.l.b16 %v164
    %v425 = vunpack.c.l.b16 %v165
    %v426 = vunpack.c.l.b16 %v166
    %v427 = vunpack.c.l.b16 %v167
    %v428 = vunpack.c.l.b16 %v168
    %v429 = vunpack.c.l.b16 %v169
    %v430 = vunpack.c.l.b16 %v170
    %v431 = vunpack.c.l.b16 %v171
    %v432 = vunpack.c.l.b16 %v172
    %v433 = vunpack.c.l.b16 %v173
    %v434 = vunpack.c.l.b16 %v174
    %v435 = vunpack.c.l.b16 %v175
    %v436 = vunpack.c.l.b16 %v176
    %v437 = vunpack.c.l.b16 %v177
    %v438 = vunpack.c.l.b16 %v178
    %v439 = vunpack.c.l.b16 %v179
    %v440 = vunpack.c.l.b16 %v180
    %v441 = vunpack.c.l.b16 %v181
    %v442 = vunpack.c.l.b16 %v182
    %v443 = vunpack.c.l.b16 %v183
    %v444 = vunpack.c.l.b16 %v184
    %v445 = vunpack.c.l.b16 %v185
    %v446 = vunpack.c.l.b16 %v186
    %v447 = vunpack.c.l.b16 %v187
    %v448 = vunpack.c.l.b16 %v188
    %v449 = vunpack.c.l.b16 %v189
    %v450 = vunpack.c.l.b16 %v190
    %v451 = vunpack.c.l.b16 %v191
    %v452 = vunpack.c.l.b16 %v192
    %v453 = vunpack.c.l.b16 %v193
    %v454 = vunpack.c.l.b16 %v194
    %v455 = vunpack.c.l.b16 %v195
    %v456 = vunpack.c.l.b16 %v196
    %v457 = vunpack.c.l.b16 %v197
    %v458 = vunpack.c.l.b16 %v198
    %v459 = vunpack.c.l.b16 %v199
    %v460 = vpack.c.b16 %v333, %v332
    %v461 = vpack.c.b16 %v335, %v334
    %v462 = vpack.c.b16 %v337, %v336
    %v463 = vpack.c.b16 %v339, %v338
    %v464 = vpack.c.b16 %v341, %v340
    %v465 = vpack.c.b16 %v343, %v342
    %v466 = vpack.c.b16 %v345, %v344
    %v467 = vpack.c.b16 %v347, %v346
    %v468 = vpack.c.b16 %v349, %v348
    %v469 = vpack.c.b16 %v351, %v350
    %v470 = vpack.c.b16 %v353, %v352
    %v471 = vpack.c.b16 %v355, %v354
    %v472 = vpack.c.b16 %v357, %v356
    %v473 = vpack.c.b16 %v359, %v358
    %v474 = vpack.c.b16 %v361, %v360
    %v475 = vpack.c.b16 %v363, %v362
    %v476 = vpack.c.b16 %v365, %v364
    %v477 = vpack.c.b16 %v367, %v366
    %v478 = vpack.c.b16 %v369, %v368
    %v479 = vpack.c.b16 %v371, %v370
    %v480 = vpack.c.b16 %v373, %v372
    %v481 = vpack.c.b16 %v375, %v374
    %v482 = vpack.c.b16 %v377, %v376
    %v483 = vpack.c.b16 %v379, %v378
    %v484 = vpack.c.b16 %v381, %v380
    %v485 = vpack.c.b16 %v383, %v382
    %v486 = vpack.c.b16 %v385, %v384
    %v487 = vpack.c.b16 %v387, %v386
    %v488 = vpack.c.b16 %v389, %v388
    %v489 = vpack.c.b16 %v391, %v390
    %v490 = vpack.c.b16 %v393, %v392
    %v491 = vpack.c.b16 %v395, %v394
    %v492 = vpack.c.b16 %v397, %v396
    %v493 = vpack.c.b16 %v399, %v398
    %v494 = vpack.c.b16 %v401, %v400
    %v495 = vpack.c.b16 %v403, %v402
    %v496 = vpack.c.b16 %v405, %v404
    %v497 = vpack.c.b16 %v407, %v406
    %v498 = vpack.c.b16 %v409, %v408
    %v499 = vpack.c.b16 %v411, %v410
    %v500 = vpack.c.b16 %v413, %v412
    %v501 = vpack.c.b16 %v415, %v414
    %v502 = vpack.c.b16 %v417, %v416
    %v503 = vpack.c.b16 %v419, %v418
    %v504 = vpack.c.b16 %v421, %v420
    %v505 = vpack.c.b16 %v423, %v422
    %v506 = vpack.c.b16 %v425, %v424
    %v507 = vpack.c.b16 %v427, %v426
    %v508 = vpack.c.b16 %v429, %v428
    %v509 = vpack.c.b16 %v431, %v430
    %v510 = vpack.c.b16 %v433, %v432
    %v511 = vpack.c.b16 %v435, %v434
    %v512 = vpack.c.b16 %v437, %v436
    %v513 = vpack.c.b16 %v439, %v438
    %v514 = vpack.c.b16 %v441, %v440
    %v515 = vpack.c.b16 %v443, %v442
    %v516 = vpack.c.b16 %v445, %v444
    %v517 = vpack.c.b16 %v447, %v446
    %v518 = vpack.c.b16 %v449, %v448
    %v519 = vpack.c.b16 %v451, %v450
    %v520 = vpack.c.b16 %v453, %v452
    %v521 = vpack.c.b16 %v455, %v454
    %v522 = vpack.c.b16 %v457, %v456
    %v523 = vpack.c.b16 %v459, %v458
    %588 = vmatprep.subr.bf16.mxu0 0
    %589 = vmatpush1.bf16.msra.mxu0 %v467
    %590 = vmatprep.subr.bf16.mxu0 0
    %591 = vmatpush1.bf16.msra.mxu0 %v466
    %592 = vmatprep.subr.bf16.mxu0 0
    %593 = vmatpush1.bf16.msra.mxu0 %v465
    %594 = vmatprep.subr.bf16.mxu0 0
    %595 = vmatpush1.bf16.msra.mxu0 %v464
    %596 = vmatprep.subr.bf16.mxu0 0
    %597 = vmatpush1.bf16.msra.mxu0 %v463
    %598 = vmatprep.subr.bf16.mxu0 0
    %599 = vmatpush1.bf16.msra.mxu0 %v462
    %600 = vmatprep.subr.bf16.mxu0 0
    %601 = vmatpush1.bf16.msra.mxu0 %v461
    %602 = vmatprep.subr.bf16.mxu0 0
    %603 = vmatpush1.bf16.msra.mxu0 %v460
    %604 = vmatprep.subr.bf16.mxu0 0
    %605 = vmatpush2.bf16.msra.mxu0 %v475
    %606 = vmatprep.subr.bf16.mxu0 0
    %607 = vmatpush2.bf16.msra.mxu0 %v474
    %608 = vmatprep.subr.bf16.mxu0 0
    %609 = vmatpush2.bf16.msra.mxu0 %v473
    %610 = vmatprep.subr.bf16.mxu0 0
    %611 = vmatpush2.bf16.msra.mxu0 %v472
    %612 = vmatprep.subr.bf16.mxu0 0
    %613 = vmatpush2.bf16.msra.mxu0 %v471
    %614 = vmatprep.subr.bf16.mxu0 0
    %615 = vmatpush2.bf16.msra.mxu0 %v470
    %616 = vmatprep.subr.bf16.mxu0 0
    %617 = vmatpush2.bf16.msra.mxu0 %v469
    %618 = vmatprep.subr.bf16.mxu0 0
    %619 = vmatpush2.bf16.msra.mxu0 %v468
    %620 = vmatprep.mubr.bf16.mxu0 %v65
    %621 = vmatmul.mubr.bf16.gmra.mxu0 %v64
    %v622 = vpop.f32.mrf.mxu0
    %v623 = vadd.f32 %v203, %v622
    %v624 = vpop.f32.mrf.mxu0
    %v625 = vpop.f32.mrf.mxu0
    %v626 = vpop.f32.mrf.mxu0
    %627 = vdwg.mxu0
    %628 = vmatprep.subr.bf16.mxu0 0
    %629 = vmatpush1.bf16.msra.mxu0 %v483
    %630 = vmatprep.subr.bf16.mxu0 0
    %631 = vmatpush1.bf16.msra.mxu0 %v482
    %632 = vmatprep.subr.bf16.mxu0 0
    %633 = vmatpush1.bf16.msra.mxu0 %v481
    %634 = vmatprep.subr.bf16.mxu0 0
    %635 = vmatpush1.bf16.msra.mxu0 %v480
    %636 = vmatprep.subr.bf16.mxu0 0
    %637 = vmatpush1.bf16.msra.mxu0 %v479
    %638 = vmatprep.subr.bf16.mxu0 0
    %639 = vmatpush1.bf16.msra.mxu0 %v478
    %640 = vmatprep.subr.bf16.mxu0 0
    %641 = vmatpush1.bf16.msra.mxu0 %v477
    %642 = vmatprep.subr.bf16.mxu0 0
    %643 = vmatpush1.bf16.msra.mxu0 %v476
    %644 = vmatprep.subr.bf16.mxu0 0
    %645 = vmatpush2.bf16.msra.mxu0 %v491
    %646 = vmatprep.subr.bf16.mxu0 0
    %647 = vmatpush2.bf16.msra.mxu0 %v490
    %648 = vmatprep.subr.bf16.mxu0 0
    %649 = vmatpush2.bf16.msra.mxu0 %v489
    %650 = vmatprep.subr.bf16.mxu0 0
    %651 = vmatpush2.bf16.msra.mxu0 %v488
    %652 = vmatprep.subr.bf16.mxu0 0
    %653 = vmatpush2.bf16.msra.mxu0 %v487
    %654 = vmatprep.subr.bf16.mxu0 0
    %655 = vmatpush2.bf16.msra.mxu0 %v486
    %656 = vmatprep.subr.bf16.mxu0 0
    %657 = vmatpush2.bf16.msra.mxu0 %v485
    %658 = vmatprep.subr.bf16.mxu0 0
    %659 = vmatpush2.bf16.msra.mxu0 %v484
    %660 = vmatprep.mubr.bf16.mxu0 %v67
    %661 = vmatmul.mubr.bf16.gmra.mxu0 %v66
    %v662 = vpop.f32.mrf.mxu0
    %v663 = vadd.f32 %v623, %v662
    %v664 = vpop.f32.mrf.mxu0
    %v665 = vpop.f32.mrf.mxu0
    %v666 = vpop.f32.mrf.mxu0
    %667 = vdwg.mxu0
    %668 = vmatprep.subr.bf16.mxu0 0
    %669 = vmatpush1.bf16.msra.mxu0 %v499
    %670 = vmatprep.subr.bf16.mxu0 0
    %671 = vmatpush1.bf16.msra.mxu0 %v498
    %672 = vmatprep.subr.bf16.mxu0 0
    %673 = vmatpush1.bf16.msra.mxu0 %v497
    %674 = vmatprep.subr.bf16.mxu0 0
    %675 = vmatpush1.bf16.msra.mxu0 %v496
    %676 = vmatprep.subr.bf16.mxu0 0
    %677 = vmatpush1.bf16.msra.mxu0 %v495
    %678 = vmatprep.subr.bf16.mxu0 0
    %679 = vmatpush1.bf16.msra.mxu0 %v494
    %680 = vmatprep.subr.bf16.mxu0 0
    %681 = vmatpush1.bf16.msra.mxu0 %v493
    %682 = vmatprep.subr.bf16.mxu0 0
    %683 = vmatpush1.bf16.msra.mxu0 %v492
    %684 = vmatprep.subr.bf16.mxu0 0
    %685 = vmatpush2.bf16.msra.mxu0 %v507
    %686 = vmatprep.subr.bf16.mxu0 0
    %687 = vmatpush2.bf16.msra.mxu0 %v506
    %688 = vmatprep.subr.bf16.mxu0 0
    %689 = vmatpush2.bf16.msra.mxu0 %v505
    %690 = vmatprep.subr.bf16.mxu0 0
    %691 = vmatpush2.bf16.msra.mxu0 %v504
    %692 = vmatprep.subr.bf16.mxu0 0
    %693 = vmatpush2.bf16.msra.mxu0 %v503
    %694 = vmatprep.subr.bf16.mxu0 0
    %695 = vmatpush2.bf16.msra.mxu0 %v502
    %696 = vmatprep.subr.bf16.mxu0 0
    %697 = vmatpush2.bf16.msra.mxu0 %v501
    %698 = vmatprep.subr.bf16.mxu0 0
    %699 = vmatpush2.bf16.msra.mxu0 %v500
    %700 = vmatprep.mubr.bf16.mxu0 %v69
    %701 = vmatmul.mubr.bf16.gmra.mxu0 %v68
    %v702 = vpop.f32.mrf.mxu0
    %v703 = vadd.f32 %v663, %v702
    %v704 = vpop.f32.mrf.mxu0
    %v705 = vpop.f32.mrf.mxu0
    %v706 = vpop.f32.mrf.mxu0
    %707 = vdwg.mxu0
    %708 = vmatprep.subr.bf16.mxu0 0
    %709 = vmatpush1.bf16.msra.mxu0 %v515
    %710 = vmatprep.subr.bf16.mxu0 0
    %711 = vmatpush1.bf16.msra.mxu0 %v514
    %712 = vmatprep.subr.bf16.mxu0 0
    %713 = vmatpush1.bf16.msra.mxu0 %v513
    %714 = vmatprep.subr.bf16.mxu0 0
    %715 = vmatpush1.bf16.msra.mxu0 %v512
    %716 = vmatprep.subr.bf16.mxu0 0
    %717 = vmatpush1.bf16.msra.mxu0 %v511
    %718 = vmatprep.subr.bf16.mxu0 0
    %719 = vmatpush1.bf16.msra.mxu0 %v510
    %720 = vmatprep.subr.bf16.mxu0 0
    %721 = vmatpush1.bf16.msra.mxu0 %v509
    %722 = vmatprep.subr.bf16.mxu0 0
    %723 = vmatpush1.bf16.msra.mxu0 %v508
    %724 = vmatprep.subr.bf16.mxu0 0
    %725 = vmatpush2.bf16.msra.mxu0 %v523
    %726 = vmatprep.subr.bf16.mxu0 0
    %727 = vmatpush2.bf16.msra.mxu0 %v522
    %728 = vmatprep.subr.bf16.mxu0 0
    %729 = vmatpush2.bf16.msra.mxu0 %v521
    %730 = vmatprep.subr.bf16.mxu0 0
    %731 = vmatpush2.bf16.msra.mxu0 %v520
    %732 = vmatprep.subr.bf16.mxu0 0
    %733 = vmatpush2.bf16.msra.mxu0 %v519
    %734 = vmatprep.subr.bf16.mxu0 0
    %735 = vmatpush2.bf16.msra.mxu0 %v518
    %736 = vmatprep.subr.bf16.mxu0 0
    %737 = vmatpush2.bf16.msra.mxu0 %v517
    %738 = vmatprep.subr.bf16.mxu0 0
    %739 = vmatpush2.bf16.msra.mxu0 %v516
    %740 = vmatprep.mubr.bf16.mxu0 %v71
    %741 = vmatmul.mubr.bf16.gmra.mxu0 %v70
    %v742 = vpop.f32.mrf.mxu0
    %v743 = vadd.f32 %v703, %v742
    %v744 = vpop.f32.mrf.mxu0
    %v745 = vpop.f32.mrf.mxu0
    %v746 = vpop.f32.mrf.mxu0
    %747 = vdwg.mxu0
    %v748 = vmax.f32 %v743, 0.0
    %v749 = vpack.c.bf16 %v748, %v748
    %v750 = vld [vmem:[%s2] sm:$0xf]
    %v751 = vld [vmem:[%s2 + $0x4] sm:$0xf]
    %v752 = vld [vmem:[%s2 + $0x8] sm:$0xf]
    %v753 = vld [vmem:[%s2 + $0xc] sm:$0xf]
    %v754 = vld [vmem:[%s2 + $0x10] sm:$0xf]
    %v755 = vld [vmem:[%s2 + $0x14] sm:$0xf]
    %v756 = vld [vmem:[%s2 + $0x18] sm:$0xf]
    %v757 = vld [vmem:[%s2 + $0x1c] sm:$0xf]
    %v758 = vld [vmem:[%s2 + $0x20] sm:$0xf]
    %v759 = vld [vmem:[%s2 + $0x24] sm:$0xf]
    %v760 = vld [vmem:[%s2 + $0x28] sm:$0xf]
    %v761 = vld [vmem:[%s2 + $0x2c] sm:$0xf]
    %v762 = vld [vmem:[%s2 + $0x30] sm:$0xf]
    %v763 = vld [vmem:[%s2 + $0x34] sm:$0xf]
    %v764 = vld [vmem:[%s2 + $0x38] sm:$0xf]
    %v765 = vld [vmem:[%s2 + $0x3c] sm:$0xf]
    %v766 = vlaneseq
    %v767 = vshrl.u32 %v766, 7
    %v768 = vsub.s32 1, %v767
    %v769 = vrot.slane %v55, %v768
    %v786 = vunpack.c.l.b16 %v750
    %v787 = vunpack.c.l.b16 %v751
    %v788 = vunpack.c.l.b16 %v752
    %v789 = vunpack.c.l.b16 %v753
    %v790 = vunpack.c.l.b16 %v754
    %v791 = vunpack.c.l.b16 %v755
    %v792 = vunpack.c.l.b16 %v756
    %v793 = vunpack.c.l.b16 %v757
    %v794 = vunpack.c.l.b16 %v758
    %v795 = vunpack.c.l.b16 %v759
    %v796 = vunpack.c.l.b16 %v760
    %v797 = vunpack.c.l.b16 %v761
    %v798 = vunpack.c.l.b16 %v762
    %v799 = vunpack.c.l.b16 %v763
    %v800 = vunpack.c.l.b16 %v764
    %v801 = vunpack.c.l.b16 %v765
    %v802 = vpack.c.b16 %v787, %v786
    %v803 = vpack.c.b16 %v789, %v788
    %v804 = vpack.c.b16 %v791, %v790
    %v805 = vpack.c.b16 %v793, %v792
    %v806 = vpack.c.b16 %v795, %v794
    %v807 = vpack.c.b16 %v797, %v796
    %v808 = vpack.c.b16 %v799, %v798
    %v809 = vpack.c.b16 %v801, %v800
    %818 = vmatprep.subr.bf16.mxu0 0
    %819 = vmatpush1.bf16.msra.mxu0 %v809
    %820 = vmatprep.subr.bf16.mxu0 0
    %821 = vmatpush1.bf16.msra.mxu0 %v808
    %822 = vmatprep.subr.bf16.mxu0 0
    %823 = vmatpush1.bf16.msra.mxu0 %v807
    %824 = vmatprep.subr.bf16.mxu0 0
    %825 = vmatpush1.bf16.msra.mxu0 %v806
    %826 = vmatprep.subr.bf16.mxu0 0
    %827 = vmatpush1.bf16.msra.mxu0 %v805
    %828 = vmatprep.subr.bf16.mxu0 0
    %829 = vmatpush1.bf16.msra.mxu0 %v804
    %830 = vmatprep.subr.bf16.mxu0 0
    %831 = vmatpush1.bf16.msra.mxu0 %v803
    %832 = vmatprep.subr.bf16.mxu0 0
    %833 = vmatpush1.bf16.msra.mxu0 %v802
    %834 = vmatprep.subr.bf16.mxu0 0
    %835 = vmatpush2.bf16.msra.mxu0 0
    %836 = vmatprep.subr.bf16.mxu0 0
    %837 = vmatpush2.bf16.msra.mxu0 0
    %838 = vmatprep.subr.bf16.mxu0 0
    %839 = vmatpush2.bf16.msra.mxu0 0
    %840 = vmatprep.subr.bf16.mxu0 0
    %841 = vmatpush2.bf16.msra.mxu0 0
    %842 = vmatprep.subr.bf16.mxu0 0
    %843 = vmatpush2.bf16.msra.mxu0 0
    %844 = vmatprep.subr.bf16.mxu0 0
    %845 = vmatpush2.bf16.msra.mxu0 0
    %846 = vmatprep.subr.bf16.mxu0 0
    %847 = vmatpush2.bf16.msra.mxu0 0
    %848 = vmatprep.subr.bf16.mxu0 0
    %849 = vmatpush2.bf16.msra.mxu0 0
    %850 = vmatprep.mubr.bf16.mxu0 0
    %851 = vmatmul.mubr.bf16.gmra.mxu0 %v749
    %v852 = vpop.f32.mrf.mxu0
    %v853 = vadd.f32 %v769, %v852
    %v854 = vpop.f32.mrf.mxu0
    %v855 = vpop.f32.mrf.mxu0
    %v856 = vpop.f32.mrf.mxu0
    %857 = vdwg.mxu0
    %v858 = vmax.f32 %v853, 0.0
    %v859 = vpack.c.bf16 %v858, %v858
    %v860 = vld [vmem:[%s3] sm:$0xf]
    %v861 = vld [vmem:[%s3 + $0x4] sm:$0xf]
    %v862 = vld [vmem:[%s3 + $0x8] sm:$0xf]
    %v863 = vld [vmem:[%s3 + $0xc] sm:$0xf]
    %v864 = vld [vmem:[%s3 + $0x10] sm:$0xf]
    %v865 = vld [vmem:[%s3 + $0x14] sm:$0xf]
    %v866 = vld [vmem:[%s3 + $0x18] sm:$0xf]
    %v867 = vld [vmem:[%s3 + $0x1c] sm:$0xf]
    %v868 = vld [vmem:[%s3 + $0x20] sm:$0xf]
    %v869 = vld [vmem:[%s3 + $0x24] sm:$0xf]
    %v870 = vld [vmem:[%s3 + $0x28] sm:$0xf]
    %v871 = vld [vmem:[%s3 + $0x2c] sm:$0xf]
    %v872 = vld [vmem:[%s3 + $0x30] sm:$0xf]
    %v873 = vld [vmem:[%s3 + $0x34] sm:$0xf]
    %v874 = vld [vmem:[%s3 + $0x38] sm:$0xf]
    %v875 = vld [vmem:[%s3 + $0x3c] sm:$0xf]
    %v876 = vlaneseq
    %v877 = vshrl.u32 %v876, 7
    %v878 = vsub.s32 2, %v877
    %v879 = vrot.slane %v55, %v878
    %v896 = vunpack.c.l.b16 %v860
    %v897 = vunpack.c.l.b16 %v861
    %v898 = vunpack.c.l.b16 %v862
    %v899 = vunpack.c.l.b16 %v863
    %v900 = vunpack.c.l.b16 %v864
    %v901 = vunpack.c.l.b16 %v865
    %v902 = vunpack.c.l.b16 %v866
    %v903 = vunpack.c.l.b16 %v867
    %v904 = vunpack.c.l.b16 %v868
    %v905 = vunpack.c.l.b16 %v869
    %v906 = vunpack.c.l.b16 %v870
    %v907 = vunpack.c.l.b16 %v871
    %v908 = vunpack.c.l.b16 %v872
    %v909 = vunpack.c.l.b16 %v873
    %v910 = vunpack.c.l.b16 %v874
    %v911 = vunpack.c.l.b16 %v875
    %v912 = vpack.c.b16 %v897, %v896
    %v913 = vpack.c.b16 %v899, %v898
    %v914 = vpack.c.b16 %v901, %v900
    %v915 = vpack.c.b16 %v903, %v902
    %v916 = vpack.c.b16 %v905, %v904
    %v917 = vpack.c.b16 %v907, %v906
    %v918 = vpack.c.b16 %v909, %v908
    %v919 = vpack.c.b16 %v911, %v910
    %928 = vmatprep.subr.bf16.mxu0 0
    %929 = vmatpush1.bf16.msra.mxu0 %v919
    %930 = vmatprep.subr.bf16.mxu0 0
    %931 = vmatpush1.bf16.msra.mxu0 %v918
    %932 = vmatprep.subr.bf16.mxu0 0
    %933 = vmatpush1.bf16.msra.mxu0 %v917
    %934 = vmatprep.subr.bf16.mxu0 0
    %935 = vmatpush1.bf16.msra.mxu0 %v916
    %936 = vmatprep.subr.bf16.mxu0 0
    %937 = vmatpush1.bf16.msra.mxu0 %v915
    %938 = vmatprep.subr.bf16.mxu0 0
    %939 = vmatpush1.bf16.msra.mxu0 %v914
    %940 = vmatprep.subr.bf16.mxu0 0
    %941 = vmatpush1.bf16.msra.mxu0 %v913
    %942 = vmatprep.subr.bf16.mxu0 0
    %943 = vmatpush1.bf16.msra.mxu0 %v912
    %944 = vmatprep.subr.bf16.mxu0 0
    %945 = vmatpush2.bf16.msra.mxu0 0
    %946 = vmatprep.subr.bf16.mxu0 0
    %947 = vmatpush2.bf16.msra.mxu0 0
    %948 = vmatprep.subr.bf16.mxu0 0
    %949 = vmatpush2.bf16.msra.mxu0 0
    %950 = vmatprep.subr.bf16.mxu0 0
    %951 = vmatpush2.bf16.msra.mxu0 0
    %952 = vmatprep.subr.bf16.mxu0 0
    %953 = vmatpush2.bf16.msra.mxu0 0
    %954 = vmatprep.subr.bf16.mxu0 0
    %955 = vmatpush2.bf16.msra.mxu0 0
    %956 = vmatprep.subr.bf16.mxu0 0
    %957 = vmatpush2.bf16.msra.mxu0 0
    %958 = vmatprep.subr.bf16.mxu0 0
    %959 = vmatpush2.bf16.msra.mxu0 0
    %960 = vmatprep.mubr.bf16.mxu0 0
    %961 = vmatmul.mubr.bf16.gmra.mxu0 %v859
    %v962 = vpop.f32.mrf.mxu0
    %v963 = vadd.f32 %v879, %v962
    %v964 = vpop.f32.mrf.mxu0
    %v965 = vpop.f32.mrf.mxu0
    %v966 = vpop.f32.mrf.mxu0
    %967 = vdwg.mxu0
    %v968 = vmax.f32 %v963, 0.0
    %v969 = vpack.c.bf16 %v968, %v968
    %v970 = vld [vmem:[%s4] sm:$0xf]
    %v971 = vld [vmem:[%s4 + $0x4] sm:$0xf]
    %v972 = vld [vmem:[%s4 + $0x8] sm:$0xf]
    %v973 = vld [vmem:[%s4 + $0xc] sm:$0xf]
    %v974 = vld [vmem:[%s4 + $0x10] sm:$0xf]
    %v975 = vld [vmem:[%s4 + $0x14] sm:$0xf]
    %v976 = vld [vmem:[%s4 + $0x18] sm:$0xf]
    %v977 = vld [vmem:[%s4 + $0x1c] sm:$0xf]
    %v978 = vld [vmem:[%s4 + $0x20] sm:$0xf]
    %v979 = vld [vmem:[%s4 + $0x24] sm:$0xf]
    %v980 = vld [vmem:[%s4 + $0x28] sm:$0xf]
    %v981 = vld [vmem:[%s4 + $0x2c] sm:$0xf]
    %v982 = vld [vmem:[%s4 + $0x30] sm:$0xf]
    %v983 = vld [vmem:[%s4 + $0x34] sm:$0xf]
    %v984 = vld [vmem:[%s4 + $0x38] sm:$0xf]
    %v985 = vld [vmem:[%s4 + $0x3c] sm:$0xf]
    %v986 = vlaneseq
    %v987 = vshrl.u32 %v986, 7
    %v988 = vsub.s32 3, %v987
    %v989 = vrot.slane %v55, %v988
    %v1006 = vunpack.c.l.b16 %v970
    %v1007 = vunpack.c.l.b16 %v971
    %v1008 = vunpack.c.l.b16 %v972
    %v1009 = vunpack.c.l.b16 %v973
    %v1010 = vunpack.c.l.b16 %v974
    %v1011 = vunpack.c.l.b16 %v975
    %v1012 = vunpack.c.l.b16 %v976
    %v1013 = vunpack.c.l.b16 %v977
    %v1014 = vunpack.c.l.b16 %v978
    %v1015 = vunpack.c.l.b16 %v979
    %v1016 = vunpack.c.l.b16 %v980
    %v1017 = vunpack.c.l.b16 %v981
    %v1018 = vunpack.c.l.b16 %v982
    %v1019 = vunpack.c.l.b16 %v983
    %v1020 = vunpack.c.l.b16 %v984
    %v1021 = vunpack.c.l.b16 %v985
    %v1022 = vpack.c.b16 %v1007, %v1006
    %v1023 = vpack.c.b16 %v1009, %v1008
    %v1024 = vpack.c.b16 %v1011, %v1010
    %v1025 = vpack.c.b16 %v1013, %v1012
    %v1026 = vpack.c.b16 %v1015, %v1014
    %v1027 = vpack.c.b16 %v1017, %v1016
    %v1028 = vpack.c.b16 %v1019, %v1018
    %v1029 = vpack.c.b16 %v1021, %v1020
    %1038 = vmatprep.subr.bf16.mxu0 0
    %1039 = vmatpush1.bf16.msra.mxu0 %v1029
    %1040 = vmatprep.subr.bf16.mxu0 0
    %1041 = vmatpush1.bf16.msra.mxu0 %v1028
    %1042 = vmatprep.subr.bf16.mxu0 0
    %1043 = vmatpush1.bf16.msra.mxu0 %v1027
    %1044 = vmatprep.subr.bf16.mxu0 0
    %1045 = vmatpush1.bf16.msra.mxu0 %v1026
    %1046 = vmatprep.subr.bf16.mxu0 0
    %1047 = vmatpush1.bf16.msra.mxu0 %v1025
    %1048 = vmatprep.subr.bf16.mxu0 0
    %1049 = vmatpush1.bf16.msra.mxu0 %v1024
    %1050 = vmatprep.subr.bf16.mxu0 0
    %1051 = vmatpush1.bf16.msra.mxu0 %v1023
    %1052 = vmatprep.subr.bf16.mxu0 0
    %1053 = vmatpush1.bf16.msra.mxu0 %v1022
    %1054 = vmatprep.subr.bf16.mxu0 0
    %1055 = vmatpush2.bf16.msra.mxu0 0
    %1056 = vmatprep.subr.bf16.mxu0 0
    %1057 = vmatpush2.bf16.msra.mxu0 0
    %1058 = vmatprep.subr.bf16.mxu0 0
    %1059 = vmatpush2.bf16.msra.mxu0 0
    %1060 = vmatprep.subr.bf16.mxu0 0
    %1061 = vmatpush2.bf16.msra.mxu0 0
    %1062 = vmatprep.subr.bf16.mxu0 0
    %1063 = vmatpush2.bf16.msra.mxu0 0
    %1064 = vmatprep.subr.bf16.mxu0 0
    %1065 = vmatpush2.bf16.msra.mxu0 0
    %1066 = vmatprep.subr.bf16.mxu0 0
    %1067 = vmatpush2.bf16.msra.mxu0 0
    %1068 = vmatprep.subr.bf16.mxu0 0
    %1069 = vmatpush2.bf16.msra.mxu0 0
    %1070 = vmatprep.mubr.bf16.mxu0 0
    %1071 = vmatmul.mubr.bf16.gmra.mxu0 %v969
    %v1072 = vpop.f32.mrf.mxu0
    %v1073 = vadd.f32 %v989, %v1072
    %v1074 = vpop.f32.mrf.mxu0
    %v1075 = vpop.f32.mrf.mxu0
    %v1076 = vpop.f32.mrf.mxu0
    %1077 = vdwg.mxu0
    %v1078 = vmax.f32 %v1073, 0.0
    %v1079 = vpack.c.bf16 %v1078, %v1078
    %v1080 = vld [vmem:[#allocation4] sm:$0xf]
    %v1081 = vld [vmem:[#allocation4 + $0x4] sm:$0xf]
    %v1082 = vld [vmem:[#allocation4 + $0x8] sm:$0xf]
    %v1083 = vld [vmem:[#allocation4 + $0xc] sm:$0xf]
    %v1084 = vld [vmem:[#allocation4 + $0x10] sm:$0xf]
    %v1085 = vld [vmem:[#allocation4 + $0x14] sm:$0xf]
    %v1086 = vld [vmem:[#allocation4 + $0x18] sm:$0xf]
    %v1087 = vld [vmem:[#allocation4 + $0x1c] sm:$0xf]
    %v1088 = vld [vmem:[#allocation4 + $0x20] sm:$0xf]
    %v1089 = vld [vmem:[#allocation4 + $0x24] sm:$0xf]
    %v1090 = vld [vmem:[#allocation4 + $0x28] sm:$0xf]
    %v1091 = vld [vmem:[#allocation4 + $0x2c] sm:$0xf]
    %v1092 = vld [vmem:[#allocation4 + $0x30] sm:$0xf]
    %v1093 = vld [vmem:[#allocation4 + $0x34] sm:$0xf]
    %v1094 = vld [vmem:[#allocation4 + $0x38] sm:$0xf]
    %v1095 = vld [vmem:[#allocation4 + $0x3c] sm:$0xf]
    %v1096 = vlaneseq
    %v1097 = vshrl.u32 %v1096, 7
    %v1098 = vsub.s32 4, %v1097
    %v1099 = vrot.slane %v55, %v1098
    %v1116 = vunpack.c.l.b16 %v1080
    %v1117 = vunpack.c.l.b16 %v1081
    %v1118 = vunpack.c.l.b16 %v1082
    %v1119 = vunpack.c.l.b16 %v1083
    %v1120 = vunpack.c.l.b16 %v1084
    %v1121 = vunpack.c.l.b16 %v1085
    %v1122 = vunpack.c.l.b16 %v1086
    %v1123 = vunpack.c.l.b16 %v1087
    %v1124 = vunpack.c.l.b16 %v1088
    %v1125 = vunpack.c.l.b16 %v1089
    %v1126 = vunpack.c.l.b16 %v1090
    %v1127 = vunpack.c.l.b16 %v1091
    %v1128 = vunpack.c.l.b16 %v1092
    %v1129 = vunpack.c.l.b16 %v1093
    %v1130 = vunpack.c.l.b16 %v1094
    %v1131 = vunpack.c.l.b16 %v1095
    %v1132 = vpack.c.b16 %v1117, %v1116
    %v1133 = vpack.c.b16 %v1119, %v1118
    %v1134 = vpack.c.b16 %v1121, %v1120
    %v1135 = vpack.c.b16 %v1123, %v1122
    %v1136 = vpack.c.b16 %v1125, %v1124
    %v1137 = vpack.c.b16 %v1127, %v1126
    %v1138 = vpack.c.b16 %v1129, %v1128
    %v1139 = vpack.c.b16 %v1131, %v1130
    %1148 = vmatprep.subr.bf16.mxu0 0
    %1149 = vmatpush1.bf16.msra.mxu0 %v1139
    %1150 = vmatprep.subr.bf16.mxu0 0
    %1151 = vmatpush1.bf16.msra.mxu0 %v1138
    %1152 = vmatprep.subr.bf16.mxu0 0
    %1153 = vmatpush1.bf16.msra.mxu0 %v1137
    %1154 = vmatprep.subr.bf16.mxu0 0
    %1155 = vmatpush1.bf16.msra.mxu0 %v1136
    %1156 = vmatprep.subr.bf16.mxu0 0
    %1157 = vmatpush1.bf16.msra.mxu0 %v1135
    %1158 = vmatprep.subr.bf16.mxu0 0
    %1159 = vmatpush1.bf16.msra.mxu0 %v1134
    %1160 = vmatprep.subr.bf16.mxu0 0
    %1161 = vmatpush1.bf16.msra.mxu0 %v1133
    %1162 = vmatprep.subr.bf16.mxu0 0
    %1163 = vmatpush1.bf16.msra.mxu0 %v1132
    %1164 = vmatprep.subr.bf16.mxu0 0
    %1165 = vmatpush2.bf16.msra.mxu0 0
    %1166 = vmatprep.subr.bf16.mxu0 0
    %1167 = vmatpush2.bf16.msra.mxu0 0
    %1168 = vmatprep.subr.bf16.mxu0 0
    %1169 = vmatpush2.bf16.msra.mxu0 0
    %1170 = vmatprep.subr.bf16.mxu0 0
    %1171 = vmatpush2.bf16.msra.mxu0 0
    %1172 = vmatprep.subr.bf16.mxu0 0
    %1173 = vmatpush2.bf16.msra.mxu0 0
    %1174 = vmatprep.subr.bf16.mxu0 0
    %1175 = vmatpush2.bf16.msra.mxu0 0
    %1176 = vmatprep.subr.bf16.mxu0 0
    %1177 = vmatpush2.bf16.msra.mxu0 0
    %1178 = vmatprep.subr.bf16.mxu0 0
    %1179 = vmatpush2.bf16.msra.mxu0 0
    %1180 = vmatprep.mubr.bf16.mxu0 0
    %1181 = vmatmul.mubr.bf16.gmra.mxu0 %v1079
    %v1182 = vpop.f32.mrf.mxu0
    %v1183 = vadd.f32 %v1099, %v1182
    %v1184 = vpop.f32.mrf.mxu0
    %v1185 = vpop.f32.mrf.mxu0
    %v1186 = vpop.f32.mrf.mxu0
    %1187 = vdwg.mxu0
    %v1188 = vpack.c.bf16 %v1183, %v1183
    %1189 = vst [vmem:[%s7] sm:$0xf] %v1188
    // Predicated region
    $region38: #{_mlp_forward_impl.1} parent=1 // pred_check
      _
    $region39: #{_mlp_forward_impl.1} parent=1 // pred_check_branch
      %1191 = sbr.rel (0) target = $region41
    $region40: #{_mlp_forward_impl.1} parent=1 // pred_region
      _
    $region41: #{_mlp_forward_impl.1} parent=1 // pred_fallthru
      _
    // Predicated region
    $region42: #{_mlp_forward_impl.1} parent=1 // pred_check
      _
    $region43: #{_mlp_forward_impl.1} parent=1 // pred_check_branch
      %1193 = sbr.rel (0) target = $region45
    $region44: #{_mlp_forward_impl.1} parent=1 // pred_region
      _
    $region45: #{_mlp_forward_impl.1} parent=1 // pred_fallthru
      _
    %1194 = vsyncpa [#allocation3], 1
    %1195 = vsyncpa [#allocation5], 1

</llo_original>
